<compile_context>
chip_gen: v7x
topology: tpu7x:2x2x1
jax: 0.10.0
libtpu: 0.0.40
codegen_flags: <defaults>
</compile_context>

<pallas_src>
import functools
import math

import jax
import jax.numpy as jnp
from jax.experimental import pallas as pl
from jax.experimental.pallas import tpu as pltpu


def _attn_kernel(q_ref, k_ref, v_ref, wq_ref, wk_ref, wv_ref, wo_ref, o_ref,
                 *, h: int, seq_len: int, seq_pad: int):
    x_q = q_ref[0]            # (S_pad, D_pad)
    x_k = k_ref[0]
    x_v = v_ref[0]
    cdt = x_q.dtype           # MXU operand dtype (f32 or bf16); accumulate f32.

    s_pad, d_pad = o_ref.shape[1], o_ref.shape[2]
    acc = jnp.zeros((s_pad, d_pad), jnp.float32)

    # kv-padding mask (static: only built if the seq axis was padded).
    if seq_pad > seq_len:
        kv_pos = jax.lax.broadcasted_iota(jnp.int32, (seq_pad, seq_pad), 1)
        kv_mask = kv_pos < seq_len
    else:
        kv_mask = None

    # Static unroll over heads: weights are already VMEM-resident, each slice
    # wq_ref[hh] is a static (zero-cost) view.
    for hh in range(h):
        wq = wq_ref[hh]       # (D_pad, d_k_pad)  pre-transposed, pre-scaled
        wk = wk_ref[hh]       # (D_pad, d_k_pad)
        wv = wv_ref[hh]       # (D_pad, d_k_pad)
        wo = wo_ref[hh]       # (d_k_pad, D_pad)  pre-transposed

        # Per-head projections: lane-dense (S_pad, d_k_pad) slabs, no weight .T.
        qh = jnp.dot(x_q, wq, preferred_element_type=jnp.float32).astype(cdt)
        kh = jnp.dot(x_k, wk, preferred_element_type=jnp.float32).astype(cdt)
        vh = jnp.dot(x_v, wv, preferred_element_type=jnp.float32).astype(cdt)

        # scores[i, j] = sum_d qh[i, d] * kh[j, d]  (contract last dims, no kh.T;
        # the 1/sqrt(d_k) scale is already folded into wq wrapper-side).
        scores = jax.lax.dot_general(
            qh, kh, (((1,), (1,)), ((), ())),
            preferred_element_type=jnp.float32)           # (S_pad, S_pad) f32

        if kv_mask is not None:
            scores = jnp.where(kv_mask, scores, -1e30)

        # fp32 softmax; normalization via EUP approx reciprocal (no divide).
        m = jnp.max(scores, axis=-1, keepdims=True)
        e = jnp.exp(scores - m)
        denom = jnp.sum(e, axis=-1, keepdims=True)
        p = (e * pl.reciprocal(denom, approx=True)).astype(cdt)

        ctx = jnp.dot(p, vh, preferred_element_type=jnp.float32).astype(cdt)

        # Output projection doubles as the head concat: accumulate ctx_h @ Wo_h.
        acc = acc + jnp.dot(ctx, wo, preferred_element_type=jnp.float32)

    o_ref[0] = acc.astype(o_ref.dtype)


def _round_up(x: int, m: int) -> int:
    return (x + m - 1) // m * m


def attention_forward(q, k, v, wq, wk, wv, wo, *, h: int,
                      compute_dtype=jnp.float32):
    """Pallas TPU forward of the PyTorch Attention module.

    q, k, v: (B, S, D).  wq/wk/wv/wo: (D, D) in PyTorch (out, in) layout.
    """
    B, S, D = q.shape
    assert D % h == 0, "not divisible"
    d_k = D // h

    LANE, SUBLANE = 128, 8
    d_pad = _round_up(D, LANE)       # lane-dense activations / output stores
    s_pad = _round_up(S, SUBLANE)
    dk_pad = _round_up(d_k, LANE)    # lane-dense per-head slabs

    scale = 1.0 / math.sqrt(d_k)

    def pad_act(x):
        x = jnp.pad(x, ((0, 0), (0, s_pad - S), (0, d_pad - D)))
        return x.astype(compute_dtype)

    def head_in_w(w, s=1.0):
        # (out, in) -> (h, D_pad, d_k_pad) so x @ w_h[head] is that head's proj.
        wt = (w * s).T                                    # (in, out)
        wh = wt.reshape(D, h, d_k).transpose(1, 0, 2)     # (h, in, d_k)
        wh = jnp.pad(wh, ((0, 0), (0, d_pad - D), (0, dk_pad - d_k)))
        return wh.astype(compute_dtype)

    def head_out_w(w):
        # (out, in) -> (h, d_k_pad, D_pad) so sum_h ctx_h @ w_h[head] == concat @ w.T
        wt = w.T                                          # (in, out); in = head*d_k + j
        wh = wt.reshape(h, d_k, D)
        wh = jnp.pad(wh, ((0, 0), (0, dk_pad - d_k), (0, d_pad - D)))
        return wh.astype(compute_dtype)

    q_p, k_p, v_p = pad_act(q), pad_act(k), pad_act(v)
    wq_h = head_in_w(wq, scale)      # softmax scale folded into wq
    wk_h = head_in_w(wk)
    wv_h = head_in_w(wv)
    wo_h = head_out_w(wo)

    kernel = functools.partial(_attn_kernel, h=h, seq_len=S, seq_pad=s_pad)

    act_spec = pl.BlockSpec((1, s_pad, d_pad), lambda b: (b, 0, 0))
    # Weight block indices are constant across the (only) grid axis, so each
    # weight tensor is DMA'd into VMEM exactly once for the whole call.
    w_in_spec = pl.BlockSpec((h, d_pad, dk_pad), lambda b: (0, 0, 0))
    w_out_spec = pl.BlockSpec((h, dk_pad, d_pad), lambda b: (0, 0, 0))

    out_pad = pl.pallas_call(
        kernel,
        out_shape=jax.ShapeDtypeStruct((B, s_pad, d_pad), q.dtype),
        grid_spec=pltpu.PrefetchScalarGridSpec(
            num_scalar_prefetch=0,
            grid=(B,),
            in_specs=[act_spec, act_spec, act_spec,
                      w_in_spec, w_in_spec, w_in_spec, w_out_spec],
            out_specs=act_spec,
        ),
        compiler_params=pltpu.CompilerParams(
            # Batch axis megacore-parallel (v7x 2 TCs).
            dimension_semantics=("parallel",),
            # Explicit VMEM budget with headroom under v7x's 64 MiB physical.
            vmem_limit_bytes=32 * 1024 * 1024,
        ),
    )(q_p, k_p, v_p, wq_h, wk_h, wv_h, wo_h)

    # Strip wrapper-side padding (cheap XLA slice); kernel stores stay lane-dense.
    return out_pad[:, :S, :D]


def attention_reference(q, k, v, wq, wk, wv, wo, *, h: int):
    """Pure-JAX reference mirroring the PyTorch forward exactly."""
    B, S, D = q.shape
    d_k = D // h

    def proj(x, w):
        return jnp.einsum("bsd,od->bso", x, w)

    query = proj(q, wq).reshape(B, S, h, d_k).transpose(0, 2, 1, 3)
    key = proj(k, wk).reshape(B, S, h, d_k).transpose(0, 2, 1, 3)
    value = proj(v, wv).reshape(B, S, h, d_k).transpose(0, 2, 1, 3)

    scores = jnp.einsum("bhqd,bhkd->bhqk", query, key) / math.sqrt(d_k)
    probs = jax.nn.softmax(scores, axis=-1)
    x = jnp.einsum("bhqk,bhkd->bhqd", probs, value)
    x = x.transpose(0, 2, 1, 3).reshape(B, S, D)
    return jnp.einsum("bsd,od->bso", x, wo)


if __name__ == "__main__":
    B, S, d_model, h = 2, 8, 32, 4

    key = jax.random.PRNGKey(0)
    kq, kk, kv, kwq, kwk, kwv, kwo = jax.random.split(key, 7)

    q = jax.random.normal(kq, (B, S, d_model), dtype=jnp.float32)
    k = jax.random.normal(kk, (B, S, d_model), dtype=jnp.float32)
    v = jax.random.normal(kv, (B, S, d_model), dtype=jnp.float32)

    # PyTorch nn.Linear weights: (out_features, in_features).
    bound = 1.0 / math.sqrt(d_model)
    wq = jax.random.uniform(kwq, (d_model, d_model), jnp.float32, -bound, bound)
    wk = jax.random.uniform(kwk, (d_model, d_model), jnp.float32, -bound, bound)
    wv = jax.random.uniform(kwv, (d_model, d_model), jnp.float32, -bound, bound)
    wo = jax.random.uniform(kwo, (d_model, d_model), jnp.float32, -bound, bound)

    ref = attention_reference(q, k, v, wq, wk, wv, wo, h=h)

    # fp32 path (matches the PyTorch module; tolerance covers the EUP
    # approximate-reciprocal softmax normalization).
    out = attention_forward(q, k, v, wq, wk, wv, wo, h=h)
    out = jax.block_until_ready(out)
    assert out.shape == (B, S, d_model)
    assert jnp.allclose(out, ref, atol=1e-2, rtol=1e-2), "fp32 kernel mismatch"

    # bf16 MXU-operand path (v6e / v7x fast path): bf16 dot operands, fp32
    # accumulation, fp32 softmax.  Loose tolerance for bf16 rounding.
    out_bf16 = attention_forward(q, k, v, wq, wk, wv, wo, h=h,
                                 compute_dtype=jnp.bfloat16)
    out_bf16 = jax.block_until_ready(out_bf16)
    assert out_bf16.shape == (B, S, d_model)
    assert jnp.allclose(out_bf16, ref, atol=1e-1, rtol=1e-1), "bf16 kernel mismatch"

    print("KERNEL_OK")
</pallas_src>

<mosaic_0001>
module attributes {stable_mosaic.version = 11 : i64} {
  func.func @_attn_kernel(%arg0: i32, %arg1: memref<1x8x128xf32, #tpu.memory_space<vmem>>, %arg2: memref<1x8x128xf32, #tpu.memory_space<vmem>>, %arg3: memref<1x8x128xf32, #tpu.memory_space<vmem>>, %arg4: memref<4x128x128xf32, #tpu.memory_space<vmem>>, %arg5: memref<4x128x128xf32, #tpu.memory_space<vmem>>, %arg6: memref<4x128x128xf32, #tpu.memory_space<vmem>>, %arg7: memref<4x128x128xf32, #tpu.memory_space<vmem>>, %arg8: memref<1x8x128xf32, #tpu.memory_space<vmem>>) attributes {dimension_semantics = [#tpu.dimension_semantics<parallel>], iteration_bounds = array<i64: 2>, scalar_prefetch = 0 : i64, scratch_operands = 0 : i64, tpu.core_type = #tpu.core_type<tc>, window_params = [{transform_indices = @transform_0, window_bounds = array<i64: 1, 8, 128>}, {transform_indices = @transform_1, window_bounds = array<i64: 1, 8, 128>}, {transform_indices = @transform_2, window_bounds = array<i64: 1, 8, 128>}, {pipeline_mode = #tpu.pipeline_mode<synchronous>, transform_indices = @transform_3, window_bounds = array<i64: 4, 128, 128>}, {pipeline_mode = #tpu.pipeline_mode<synchronous>, transform_indices = @transform_4, window_bounds = array<i64: 4, 128, 128>}, {pipeline_mode = #tpu.pipeline_mode<synchronous>, transform_indices = @transform_5, window_bounds = array<i64: 4, 128, 128>}, {pipeline_mode = #tpu.pipeline_mode<synchronous>, transform_indices = @transform_6, window_bounds = array<i64: 4, 128, 128>}, {transform_indices = @transform_7, window_bounds = array<i64: 1, 8, 128>}]} {
    %c0 = arith.constant 0 : index
    %c0_0 = arith.constant 0 : index
    %c0_1 = arith.constant 0 : index
    %0 = vector.load %arg1[%c0, %c0_0, %c0_1] : memref<1x8x128xf32, #tpu.memory_space<vmem>>, vector<1x8x128xf32>
    %1 = vector.shape_cast %0 : vector<1x8x128xf32> to vector<8x128xf32>
    %c0_2 = arith.constant 0 : index
    %c0_3 = arith.constant 0 : index
    %c0_4 = arith.constant 0 : index
    %2 = vector.load %arg2[%c0_2, %c0_3, %c0_4] : memref<1x8x128xf32, #tpu.memory_space<vmem>>, vector<1x8x128xf32>
    %3 = vector.shape_cast %2 : vector<1x8x128xf32> to vector<8x128xf32>
    %c0_5 = arith.constant 0 : index
    %c0_6 = arith.constant 0 : index
    %c0_7 = arith.constant 0 : index
    %4 = vector.load %arg3[%c0_5, %c0_6, %c0_7] : memref<1x8x128xf32, #tpu.memory_space<vmem>>, vector<1x8x128xf32>
    %5 = vector.shape_cast %4 : vector<1x8x128xf32> to vector<8x128xf32>
    %cst = arith.constant 0.000000e+00 : f32
    %6 = vector.broadcast %cst : f32 to vector<8x128xf32>
    %c0_8 = arith.constant 0 : index
    %c0_9 = arith.constant 0 : index
    %c0_10 = arith.constant 0 : index
    %7 = vector.load %arg4[%c0_8, %c0_9, %c0_10] : memref<4x128x128xf32, #tpu.memory_space<vmem>>, vector<1x128x128xf32>
    %8 = vector.shape_cast %7 : vector<1x128x128xf32> to vector<128x128xf32>
    %c0_11 = arith.constant 0 : index
    %c0_12 = arith.constant 0 : index
    %c0_13 = arith.constant 0 : index
    %9 = vector.load %arg5[%c0_11, %c0_12, %c0_13] : memref<4x128x128xf32, #tpu.memory_space<vmem>>, vector<1x128x128xf32>
    %10 = vector.shape_cast %9 : vector<1x128x128xf32> to vector<128x128xf32>
    %c0_14 = arith.constant 0 : index
    %c0_15 = arith.constant 0 : index
    %c0_16 = arith.constant 0 : index
    %11 = vector.load %arg6[%c0_14, %c0_15, %c0_16] : memref<4x128x128xf32, #tpu.memory_space<vmem>>, vector<1x128x128xf32>
    %12 = vector.shape_cast %11 : vector<1x128x128xf32> to vector<128x128xf32>
    %c0_17 = arith.constant 0 : index
    %c0_18 = arith.constant 0 : index
    %c0_19 = arith.constant 0 : index
    %13 = vector.load %arg7[%c0_17, %c0_18, %c0_19] : memref<4x128x128xf32, #tpu.memory_space<vmem>>, vector<1x128x128xf32>
    %14 = vector.shape_cast %13 : vector<1x128x128xf32> to vector<128x128xf32>
    %cst_20 = arith.constant dense<0.000000e+00> : vector<8x128xf32>
    %15 = tpu.matmul %1, %8, %cst_20 {dimension_numbers = #tpu.dot_dimension_numbers<[1], [0], [0], [1], [0, 0, 1, 1], [], []>} : vector<8x128xf32>, vector<128x128xf32>, vector<8x128xf32> -> vector<8x128xf32>
    %cst_21 = arith.constant dense<0.000000e+00> : vector<8x128xf32>
    %16 = tpu.matmul %3, %10, %cst_21 {dimension_numbers = #tpu.dot_dimension_numbers<[1], [0], [0], [1], [0, 0, 1, 1], [], []>} : vector<8x128xf32>, vector<128x128xf32>, vector<8x128xf32> -> vector<8x128xf32>
    %cst_22 = arith.constant dense<0.000000e+00> : vector<8x128xf32>
    %17 = tpu.matmul %5, %12, %cst_22 {dimension_numbers = #tpu.dot_dimension_numbers<[1], [0], [0], [1], [0, 0, 1, 1], [], []>} : vector<8x128xf32>, vector<128x128xf32>, vector<8x128xf32> -> vector<8x128xf32>
    %cst_23 = arith.constant dense<0.000000e+00> : vector<8x8xf32>
    %18 = tpu.matmul %15, %16, %cst_23 {dimension_numbers = #tpu.dot_dimension_numbers<[1], [1], [0], [0], [0, 0, 1, 0], [], []>} : vector<8x128xf32>, vector<8x128xf32>, vector<8x8xf32> -> vector<8x8xf32>
    %cst_24 = arith.constant dense<0xFF800000> : vector<8xf32>
    %19 = vector.multi_reduction <maximumf>, %18, %cst_24 [1] : vector<8x8xf32> to vector<8xf32>
    %20 = vector.shape_cast %19 : vector<8xf32> to vector<8x1xf32>
    %21 = vector.broadcast %20 : vector<8x1xf32> to vector<8x8xf32>
    %22 = arith.subf %18, %21 : vector<8x8xf32>
    %23 = math.exp %22 : vector<8x8xf32>
    %cst_25 = arith.constant dense<0.000000e+00> : vector<8xf32>
    %24 = vector.multi_reduction <add>, %23, %cst_25 [1] : vector<8x8xf32> to vector<8xf32>
    %25 = vector.shape_cast %24 : vector<8xf32> to vector<8x1xf32>
    %26 = tpu.reciprocal %25 {approx = true} : vector<8x1xf32> -> vector<8x1xf32>
    %27 = vector.broadcast %26 : vector<8x1xf32> to vector<8x8xf32>
    %28 = arith.mulf %23, %27 : vector<8x8xf32>
    %cst_26 = arith.constant dense<0.000000e+00> : vector<8x128xf32>
    %29 = tpu.matmul %28, %17, %cst_26 {dimension_numbers = #tpu.dot_dimension_numbers<[1], [0], [0], [1], [0, 0, 1, 1], [], []>} : vector<8x8xf32>, vector<8x128xf32>, vector<8x128xf32> -> vector<8x128xf32>
    %cst_27 = arith.constant dense<0.000000e+00> : vector<8x128xf32>
    %30 = tpu.matmul %29, %14, %cst_27 {dimension_numbers = #tpu.dot_dimension_numbers<[1], [0], [0], [1], [0, 0, 1, 1], [], []>} : vector<8x128xf32>, vector<128x128xf32>, vector<8x128xf32> -> vector<8x128xf32>
    %31 = arith.addf %6, %30 : vector<8x128xf32>
    %c1 = arith.constant 1 : index
    %c0_28 = arith.constant 0 : index
    %c0_29 = arith.constant 0 : index
    %32 = vector.load %arg4[%c1, %c0_28, %c0_29] : memref<4x128x128xf32, #tpu.memory_space<vmem>>, vector<1x128x128xf32>
    %33 = vector.shape_cast %32 : vector<1x128x128xf32> to vector<128x128xf32>
    %c1_30 = arith.constant 1 : index
    %c0_31 = arith.constant 0 : index
    %c0_32 = arith.constant 0 : index
    %34 = vector.load %arg5[%c1_30, %c0_31, %c0_32] : memref<4x128x128xf32, #tpu.memory_space<vmem>>, vector<1x128x128xf32>
    %35 = vector.shape_cast %34 : vector<1x128x128xf32> to vector<128x128xf32>
    %c1_33 = arith.constant 1 : index
    %c0_34 = arith.constant 0 : index
    %c0_35 = arith.constant 0 : index
    %36 = vector.load %arg6[%c1_33, %c0_34, %c0_35] : memref<4x128x128xf32, #tpu.memory_space<vmem>>, vector<1x128x128xf32>
    %37 = vector.shape_cast %36 : vector<1x128x128xf32> to vector<128x128xf32>
    %c1_36 = arith.constant 1 : index
    %c0_37 = arith.constant 0 : index
    %c0_38 = arith.constant 0 : index
    %38 = vector.load %arg7[%c1_36, %c0_37, %c0_38] : memref<4x128x128xf32, #tpu.memory_space<vmem>>, vector<1x128x128xf32>
    %39 = vector.shape_cast %38 : vector<1x128x128xf32> to vector<128x128xf32>
    %cst_39 = arith.constant dense<0.000000e+00> : vector<8x128xf32>
    %40 = tpu.matmul %1, %33, %cst_39 {dimension_numbers = #tpu.dot_dimension_numbers<[1], [0], [0], [1], [0, 0, 1, 1], [], []>} : vector<8x128xf32>, vector<128x128xf32>, vector<8x128xf32> -> vector<8x128xf32>
    %cst_40 = arith.constant dense<0.000000e+00> : vector<8x128xf32>
    %41 = tpu.matmul %3, %35, %cst_40 {dimension_numbers = #tpu.dot_dimension_numbers<[1], [0], [0], [1], [0, 0, 1, 1], [], []>} : vector<8x128xf32>, vector<128x128xf32>, vector<8x128xf32> -> vector<8x128xf32>
    %cst_41 = arith.constant dense<0.000000e+00> : vector<8x128xf32>
    %42 = tpu.matmul %5, %37, %cst_41 {dimension_numbers = #tpu.dot_dimension_numbers<[1], [0], [0], [1], [0, 0, 1, 1], [], []>} : vector<8x128xf32>, vector<128x128xf32>, vector<8x128xf32> -> vector<8x128xf32>
    %cst_42 = arith.constant dense<0.000000e+00> : vector<8x8xf32>
    %43 = tpu.matmul %40, %41, %cst_42 {dimension_numbers = #tpu.dot_dimension_numbers<[1], [1], [0], [0], [0, 0, 1, 0], [], []>} : vector<8x128xf32>, vector<8x128xf32>, vector<8x8xf32> -> vector<8x8xf32>
    %cst_43 = arith.constant dense<0xFF800000> : vector<8xf32>
    %44 = vector.multi_reduction <maximumf>, %43, %cst_43 [1] : vector<8x8xf32> to vector<8xf32>
    %45 = vector.shape_cast %44 : vector<8xf32> to vector<8x1xf32>
    %46 = vector.broadcast %45 : vector<8x1xf32> to vector<8x8xf32>
    %47 = arith.subf %43, %46 : vector<8x8xf32>
    %48 = math.exp %47 : vector<8x8xf32>
    %cst_44 = arith.constant dense<0.000000e+00> : vector<8xf32>
    %49 = vector.multi_reduction <add>, %48, %cst_44 [1] : vector<8x8xf32> to vector<8xf32>
    %50 = vector.shape_cast %49 : vector<8xf32> to vector<8x1xf32>
    %51 = tpu.reciprocal %50 {approx = true} : vector<8x1xf32> -> vector<8x1xf32>
    %52 = vector.broadcast %51 : vector<8x1xf32> to vector<8x8xf32>
    %53 = arith.mulf %48, %52 : vector<8x8xf32>
    %cst_45 = arith.constant dense<0.000000e+00> : vector<8x128xf32>
    %54 = tpu.matmul %53, %42, %cst_45 {dimension_numbers = #tpu.dot_dimension_numbers<[1], [0], [0], [1], [0, 0, 1, 1], [], []>} : vector<8x8xf32>, vector<8x128xf32>, vector<8x128xf32> -> vector<8x128xf32>
    %cst_46 = arith.constant dense<0.000000e+00> : vector<8x128xf32>
    %55 = tpu.matmul %54, %39, %cst_46 {dimension_numbers = #tpu.dot_dimension_numbers<[1], [0], [0], [1], [0, 0, 1, 1], [], []>} : vector<8x128xf32>, vector<128x128xf32>, vector<8x128xf32> -> vector<8x128xf32>
    %56 = arith.addf %31, %55 : vector<8x128xf32>
    %c2 = arith.constant 2 : index
    %c0_47 = arith.constant 0 : index
    %c0_48 = arith.constant 0 : index
    %57 = vector.load %arg4[%c2, %c0_47, %c0_48] : memref<4x128x128xf32, #tpu.memory_space<vmem>>, vector<1x128x128xf32>
    %58 = vector.shape_cast %57 : vector<1x128x128xf32> to vector<128x128xf32>
    %c2_49 = arith.constant 2 : index
    %c0_50 = arith.constant 0 : index
    %c0_51 = arith.constant 0 : index
    %59 = vector.load %arg5[%c2_49, %c0_50, %c0_51] : memref<4x128x128xf32, #tpu.memory_space<vmem>>, vector<1x128x128xf32>
    %60 = vector.shape_cast %59 : vector<1x128x128xf32> to vector<128x128xf32>
    %c2_52 = arith.constant 2 : index
    %c0_53 = arith.constant 0 : index
    %c0_54 = arith.constant 0 : index
    %61 = vector.load %arg6[%c2_52, %c0_53, %c0_54] : memref<4x128x128xf32, #tpu.memory_space<vmem>>, vector<1x128x128xf32>
    %62 = vector.shape_cast %61 : vector<1x128x128xf32> to vector<128x128xf32>
    %c2_55 = arith.constant 2 : index
    %c0_56 = arith.constant 0 : index
    %c0_57 = arith.constant 0 : index
    %63 = vector.load %arg7[%c2_55, %c0_56, %c0_57] : memref<4x128x128xf32, #tpu.memory_space<vmem>>, vector<1x128x128xf32>
    %64 = vector.shape_cast %63 : vector<1x128x128xf32> to vector<128x128xf32>
    %cst_58 = arith.constant dense<0.000000e+00> : vector<8x128xf32>
    %65 = tpu.matmul %1, %58, %cst_58 {dimension_numbers = #tpu.dot_dimension_numbers<[1], [0], [0], [1], [0, 0, 1, 1], [], []>} : vector<8x128xf32>, vector<128x128xf32>, vector<8x128xf32> -> vector<8x128xf32>
    %cst_59 = arith.constant dense<0.000000e+00> : vector<8x128xf32>
    %66 = tpu.matmul %3, %60, %cst_59 {dimension_numbers = #tpu.dot_dimension_numbers<[1], [0], [0], [1], [0, 0, 1, 1], [], []>} : vector<8x128xf32>, vector<128x128xf32>, vector<8x128xf32> -> vector<8x128xf32>
    %cst_60 = arith.constant dense<0.000000e+00> : vector<8x128xf32>
    %67 = tpu.matmul %5, %62, %cst_60 {dimension_numbers = #tpu.dot_dimension_numbers<[1], [0], [0], [1], [0, 0, 1, 1], [], []>} : vector<8x128xf32>, vector<128x128xf32>, vector<8x128xf32> -> vector<8x128xf32>
    %cst_61 = arith.constant dense<0.000000e+00> : vector<8x8xf32>
    %68 = tpu.matmul %65, %66, %cst_61 {dimension_numbers = #tpu.dot_dimension_numbers<[1], [1], [0], [0], [0, 0, 1, 0], [], []>} : vector<8x128xf32>, vector<8x128xf32>, vector<8x8xf32> -> vector<8x8xf32>
    %cst_62 = arith.constant dense<0xFF800000> : vector<8xf32>
    %69 = vector.multi_reduction <maximumf>, %68, %cst_62 [1] : vector<8x8xf32> to vector<8xf32>
    %70 = vector.shape_cast %69 : vector<8xf32> to vector<8x1xf32>
    %71 = vector.broadcast %70 : vector<8x1xf32> to vector<8x8xf32>
    %72 = arith.subf %68, %71 : vector<8x8xf32>
    %73 = math.exp %72 : vector<8x8xf32>
    %cst_63 = arith.constant dense<0.000000e+00> : vector<8xf32>
    %74 = vector.multi_reduction <add>, %73, %cst_63 [1] : vector<8x8xf32> to vector<8xf32>
    %75 = vector.shape_cast %74 : vector<8xf32> to vector<8x1xf32>
    %76 = tpu.reciprocal %75 {approx = true} : vector<8x1xf32> -> vector<8x1xf32>
    %77 = vector.broadcast %76 : vector<8x1xf32> to vector<8x8xf32>
    %78 = arith.mulf %73, %77 : vector<8x8xf32>
    %cst_64 = arith.constant dense<0.000000e+00> : vector<8x128xf32>
    %79 = tpu.matmul %78, %67, %cst_64 {dimension_numbers = #tpu.dot_dimension_numbers<[1], [0], [0], [1], [0, 0, 1, 1], [], []>} : vector<8x8xf32>, vector<8x128xf32>, vector<8x128xf32> -> vector<8x128xf32>
    %cst_65 = arith.constant dense<0.000000e+00> : vector<8x128xf32>
    %80 = tpu.matmul %79, %64, %cst_65 {dimension_numbers = #tpu.dot_dimension_numbers<[1], [0], [0], [1], [0, 0, 1, 1], [], []>} : vector<8x128xf32>, vector<128x128xf32>, vector<8x128xf32> -> vector<8x128xf32>
    %81 = arith.addf %56, %80 : vector<8x128xf32>
    %c3 = arith.constant 3 : index
    %c0_66 = arith.constant 0 : index
    %c0_67 = arith.constant 0 : index
    %82 = vector.load %arg4[%c3, %c0_66, %c0_67] : memref<4x128x128xf32, #tpu.memory_space<vmem>>, vector<1x128x128xf32>
    %83 = vector.shape_cast %82 : vector<1x128x128xf32> to vector<128x128xf32>
    %c3_68 = arith.constant 3 : index
    %c0_69 = arith.constant 0 : index
    %c0_70 = arith.constant 0 : index
    %84 = vector.load %arg5[%c3_68, %c0_69, %c0_70] : memref<4x128x128xf32, #tpu.memory_space<vmem>>, vector<1x128x128xf32>
    %85 = vector.shape_cast %84 : vector<1x128x128xf32> to vector<128x128xf32>
    %c3_71 = arith.constant 3 : index
    %c0_72 = arith.constant 0 : index
    %c0_73 = arith.constant 0 : index
    %86 = vector.load %arg6[%c3_71, %c0_72, %c0_73] : memref<4x128x128xf32, #tpu.memory_space<vmem>>, vector<1x128x128xf32>
    %87 = vector.shape_cast %86 : vector<1x128x128xf32> to vector<128x128xf32>
    %c3_74 = arith.constant 3 : index
    %c0_75 = arith.constant 0 : index
    %c0_76 = arith.constant 0 : index
    %88 = vector.load %arg7[%c3_74, %c0_75, %c0_76] : memref<4x128x128xf32, #tpu.memory_space<vmem>>, vector<1x128x128xf32>
    %89 = vector.shape_cast %88 : vector<1x128x128xf32> to vector<128x128xf32>
    %cst_77 = arith.constant dense<0.000000e+00> : vector<8x128xf32>
    %90 = tpu.matmul %1, %83, %cst_77 {dimension_numbers = #tpu.dot_dimension_numbers<[1], [0], [0], [1], [0, 0, 1, 1], [], []>} : vector<8x128xf32>, vector<128x128xf32>, vector<8x128xf32> -> vector<8x128xf32>
    %cst_78 = arith.constant dense<0.000000e+00> : vector<8x128xf32>
    %91 = tpu.matmul %3, %85, %cst_78 {dimension_numbers = #tpu.dot_dimension_numbers<[1], [0], [0], [1], [0, 0, 1, 1], [], []>} : vector<8x128xf32>, vector<128x128xf32>, vector<8x128xf32> -> vector<8x128xf32>
    %cst_79 = arith.constant dense<0.000000e+00> : vector<8x128xf32>
    %92 = tpu.matmul %5, %87, %cst_79 {dimension_numbers = #tpu.dot_dimension_numbers<[1], [0], [0], [1], [0, 0, 1, 1], [], []>} : vector<8x128xf32>, vector<128x128xf32>, vector<8x128xf32> -> vector<8x128xf32>
    %cst_80 = arith.constant dense<0.000000e+00> : vector<8x8xf32>
    %93 = tpu.matmul %90, %91, %cst_80 {dimension_numbers = #tpu.dot_dimension_numbers<[1], [1], [0], [0], [0, 0, 1, 0], [], []>} : vector<8x128xf32>, vector<8x128xf32>, vector<8x8xf32> -> vector<8x8xf32>
    %cst_81 = arith.constant dense<0xFF800000> : vector<8xf32>
    %94 = vector.multi_reduction <maximumf>, %93, %cst_81 [1] : vector<8x8xf32> to vector<8xf32>
    %95 = vector.shape_cast %94 : vector<8xf32> to vector<8x1xf32>
    %96 = vector.broadcast %95 : vector<8x1xf32> to vector<8x8xf32>
    %97 = arith.subf %93, %96 : vector<8x8xf32>
    %98 = math.exp %97 : vector<8x8xf32>
    %cst_82 = arith.constant dense<0.000000e+00> : vector<8xf32>
    %99 = vector.multi_reduction <add>, %98, %cst_82 [1] : vector<8x8xf32> to vector<8xf32>
    %100 = vector.shape_cast %99 : vector<8xf32> to vector<8x1xf32>
    %101 = tpu.reciprocal %100 {approx = true} : vector<8x1xf32> -> vector<8x1xf32>
    %102 = vector.broadcast %101 : vector<8x1xf32> to vector<8x8xf32>
    %103 = arith.mulf %98, %102 : vector<8x8xf32>
    %cst_83 = arith.constant dense<0.000000e+00> : vector<8x128xf32>
    %104 = tpu.matmul %103, %92, %cst_83 {dimension_numbers = #tpu.dot_dimension_numbers<[1], [0], [0], [1], [0, 0, 1, 1], [], []>} : vector<8x8xf32>, vector<8x128xf32>, vector<8x128xf32> -> vector<8x128xf32>
    %cst_84 = arith.constant dense<0.000000e+00> : vector<8x128xf32>
    %105 = tpu.matmul %104, %89, %cst_84 {dimension_numbers = #tpu.dot_dimension_numbers<[1], [0], [0], [1], [0, 0, 1, 1], [], []>} : vector<8x128xf32>, vector<128x128xf32>, vector<8x128xf32> -> vector<8x128xf32>
    %106 = arith.addf %81, %105 : vector<8x128xf32>
    %c0_85 = arith.constant 0 : index
    %c0_86 = arith.constant 0 : index
    %c0_87 = arith.constant 0 : index
    %107 = vector.load %arg8[%c0_85, %c0_86, %c0_87] : memref<1x8x128xf32, #tpu.memory_space<vmem>>, vector<1x8x128xf32>
    %108 = vector.shape_cast %107 : vector<1x8x128xf32> to vector<8x128xf32>
    %109 = vector.shape_cast %106 : vector<8x128xf32> to vector<1x8x128xf32>
    tpu.vector_store %arg8[%c0_85, %c0_86, %c0_87], %109 {strides = array<i32>} : memref<1x8x128xf32, #tpu.memory_space<vmem>>, vector<1x8x128xf32>,
    return
  }
  func.func @transform_0(%arg0: i32) -> (i32, i32, i32) {
    %c0_i32 = arith.constant 0 : i32
    %c0_i32_0 = arith.constant 0 : i32
    %c0_i32_1 = arith.constant 0 : i32
    return %arg0, %c0_i32, %c0_i32_0 : i32, i32, i32
  }
  func.func @transform_1(%arg0: i32) -> (i32, i32, i32) {
    %c0_i32 = arith.constant 0 : i32
    %c0_i32_0 = arith.constant 0 : i32
    %c0_i32_1 = arith.constant 0 : i32
    return %arg0, %c0_i32, %c0_i32_0 : i32, i32, i32
  }
  func.func @transform_2(%arg0: i32) -> (i32, i32, i32) {
    %c0_i32 = arith.constant 0 : i32
    %c0_i32_0 = arith.constant 0 : i32
    %c0_i32_1 = arith.constant 0 : i32
    return %arg0, %c0_i32, %c0_i32_0 : i32, i32, i32
  }
  func.func @transform_3(%arg0: i32) -> (i32, i32, i32) {
    %c0_i32 = arith.constant 0 : i32
    %c0_i32_0 = arith.constant 0 : i32
    %c0_i32_1 = arith.constant 0 : i32
    %c0_i32_2 = arith.constant 0 : i32
    return %c0_i32, %c0_i32_0, %c0_i32_1 : i32, i32, i32
  }
  func.func @transform_4(%arg0: i32) -> (i32, i32, i32) {
    %c0_i32 = arith.constant 0 : i32
    %c0_i32_0 = arith.constant 0 : i32
    %c0_i32_1 = arith.constant 0 : i32
    %c0_i32_2 = arith.constant 0 : i32
    return %c0_i32, %c0_i32_0, %c0_i32_1 : i32, i32, i32
  }
  func.func @transform_5(%arg0: i32) -> (i32, i32, i32) {
    %c0_i32 = arith.constant 0 : i32
    %c0_i32_0 = arith.constant 0 : i32
    %c0_i32_1 = arith.constant 0 : i32
    %c0_i32_2 = arith.constant 0 : i32
    return %c0_i32, %c0_i32_0, %c0_i32_1 : i32, i32, i32
  }
  func.func @transform_6(%arg0: i32) -> (i32, i32, i32) {
    %c0_i32 = arith.constant 0 : i32
    %c0_i32_0 = arith.constant 0 : i32
    %c0_i32_1 = arith.constant 0 : i32
    %c0_i32_2 = arith.constant 0 : i32
    return %c0_i32, %c0_i32_0, %c0_i32_1 : i32, i32, i32
  }
  func.func @transform_7(%arg0: i32) -> (i32, i32, i32) {
    %c0_i32 = arith.constant 0 : i32
    %c0_i32_0 = arith.constant 0 : i32
    %c0_i32_1 = arith.constant 0 : i32
    return %arg0, %c0_i32, %c0_i32_0 : i32, i32, i32
  }
}

</mosaic_0001>

<llo_original>
// kernel: tpu_custom_call.1
$region0: #{tpu_custom_call.1}
  #allocation0 [shape = 'u32[]', space=smem, size = 0x4, offset = 0x4, fixed_abs, tag = 'smem constant byte address 0x4 - core index']
  #allocation1 [shape = 'u32[144,128]{1,0:T(1,128)}', space=vmem, size = 0x12000, scoped, tag = 'internal scratch']
  %s0 = inlined_call_operand.hbm [shape: f32[2,8,128], index: 0, kind: input, shape index: {}]
  %s1 = inlined_call_operand.hbm [shape: f32[2,8,128], index: 1, kind: input, shape index: {}]
  %s2 = inlined_call_operand.hbm [shape: f32[2,8,128], index: 2, kind: input, shape index: {}]
  %s3 = inlined_call_operand.hbm [shape: f32[4,128,128], index: 3, kind: input, shape index: {}]
  %s4 = inlined_call_operand.hbm [shape: f32[4,128,128], index: 4, kind: input, shape index: {}]
  %s5 = inlined_call_operand.hbm [shape: f32[4,128,128], index: 5, kind: input, shape index: {}]
  %s6 = inlined_call_operand.hbm [shape: f32[4,128,128], index: 6, kind: input, shape index: {}]
  %s7 = inlined_call_operand.hbm [shape: f32[2,8,128], index: 7, kind: output, shape index: {}]
  %s8 = sld [smem:[#allocation0]]
  $region89: #{tpu_custom_call.1} parent=0
    _
  %s10 = ssub.s32 1, %s8
  %s11 = scalar_select 0, %s10, %s8
  $region1: #{tpu_custom_call.1} parent=0
    #allocation2 [shape = 'u8[8192]{0}', space=vmem, size = 0x2000, scoped, tag = 'input window, operand 0']
    #allocation3 [shape = 's32[2]{0}', space=sflag, size = 0x8, scoped, tag = 'scoped memory for tpu_custom_call.1']
    #allocation4 [shape = 's32[2]{0}', space=sflag, size = 0x8, scoped, tag = 'scoped memory for tpu_custom_call.1']
    #allocation5 [shape = 'u8[8192]{0}', space=vmem, size = 0x2000, scoped, tag = 'input window, operand 1']
    #allocation6 [shape = 's32[2]{0}', space=sflag, size = 0x8, scoped, tag = 'scoped memory for tpu_custom_call.1']
    #allocation7 [shape = 'u8[8192]{0}', space=vmem, size = 0x2000, scoped, tag = 'input window, operand 2']
    #allocation8 [shape = 'u8[262144]{0}', space=vmem, size = 0x40000, scoped, tag = 'input window, operand 3, single buffered']
    #allocation9 [shape = 's32[1]{0}', space=sflag, size = 0x4, scoped, tag = 'scoped memory for tpu_custom_call.1']
    #allocation10 [shape = 'u8[262144]{0}', space=vmem, size = 0x40000, scoped, tag = 'input window, operand 4, single buffered']
    #allocation11 [shape = 'u8[262144]{0}', space=vmem, size = 0x40000, scoped, tag = 'input window, operand 5, single buffered']
    #allocation12 [shape = 's32[1]{0}', space=sflag, size = 0x4, scoped, tag = 'scoped memory for tpu_custom_call.1']
    #allocation13 [shape = 'u8[262144]{0}', space=vmem, size = 0x40000, scoped, tag = 'input window, operand 6, single buffered']
    #allocation14 [shape = 'u8[8192]{0}', space=vmem, size = 0x2000, scoped, tag = 'output window, operand 0']
    %12 = vsyncpa [#allocation3], 0
    %s13 = scalar_lea.sflag [#allocation3], 1
    %14 = vsyncpa %s13, 0
    %15 = vsyncpa [#allocation6], 0
    %s16 = scalar_lea.sflag [#allocation6], 1
    %17 = vsyncpa %s16, 0
    %18 = vsyncpa [#allocation9], 0
    %19 = vsyncpa [#allocation12], 0
    %20 = vsyncpa [#allocation4], 0
    %s21 = scalar_lea.sflag [#allocation4], 1
    %22 = vsyncpa %s21, 0
    loop: start=0, step=1, limit=4
    $region2: #{tpu_custom_call.1} parent=1 // loop_pre_header
      _
    $region3: #{tpu_custom_call.1} parent=1 // loop_header
      %s24 = sphi 0, %s28
      %p25 = scmp.ge.s32.totalorder %s24, 4
      %s34 = sphi 0, %s36
      %s37 = sphi 0, %s34
      %s38 = sphi 0, %s37
      %s54 = sphi 0, %s38
      %s60 = sphi 0, %s62
      %s63 = sphi 0, %s60
      %s64 = sphi 0, %s63
      %s80 = sphi 0, %s64
      %s86 = sphi 0, %s88
      %s89 = sphi 0, %s86
      %s90 = sphi 0, %s89
      %s106 = sphi 0, %s90
      %s110 = sphi 0, %s110
      %s112 = sphi 0, %s110
      %s113 = sphi 0, %s112
      %s127 = sphi 0, %s113
      %s131 = sphi 0, %s131
      %s133 = sphi 0, %s131
      %s134 = sphi 0, %s133
      %s148 = sphi 0, %s134
      %s152 = sphi 0, %s152
      %s154 = sphi 0, %s152
      %s155 = sphi 0, %s154
      %s169 = sphi 0, %s155
      %s173 = sphi 0, %s173
      %s175 = sphi 0, %s173
      %s176 = sphi 0, %s175
      %s190 = sphi 0, %s176
      %s196 = sphi 0, %s198
      %s199 = sphi 0, %s196
      %s200 = sphi 0, %s199
      %s216 = sphi 0, %s200
    $region4: #{tpu_custom_call.1} parent=1 // loop_header_branch
      %27 = sbr.rel (%p25) target = $region8
    $region5: #{tpu_custom_call.1} parent=1 // loop_body
      %s29 = ssub.s32 %s24, 1
      %s30 = ssub.s32 %s24, 2
      %s31 = sadd.s32 %s24, 1
      %s32 = ssub.s32 %s24, %s31
      %p33 = scmp.eq.s32.totalorder %s32, 0
      %s35 = sadd.s32 %s34, 1
      %s36 = scalar_select %p33, %s34, %s35
      %p39 = pneg %p33
      %p40 = scmp.eq.s32.totalorder %s24, 1
      %p41 = por %p39, %p40
      %p42 = scmp.ne.s32.totalorder %s34, %s37
      %p43 = scmp.eq.s32.totalorder %s24, 0
      %p44 = por %p42, %p43
      %p45 = scmp.ne.s32.totalorder %s34, %s37
      %p46 = scmp.eq.s32.totalorder %s29, 1
      %p47 = por %p45, %p46
      %p48 = scmp.ne.s32.totalorder %s37, %s38
      %p49 = scmp.eq.s32.totalorder %s29, 0
      %p50 = por %p48, %p49
      %p51 = scmp.ne.s32.totalorder %s37, %s38
      %p52 = scmp.eq.s32.totalorder %s30, 1
      %p53 = por %p51, %p52
      %p55 = scmp.ne.s32.totalorder %s38, %s54
      %p56 = scmp.eq.s32.totalorder %s30, 0
      %p57 = por %p55, %p56
      %s58 = ssub.s32 %s24, %s31
      %p59 = scmp.eq.s32.totalorder %s58, 0
      %s61 = sadd.s32 %s60, 1
      %s62 = scalar_select %p59, %s60, %s61
      %p65 = pneg %p59
      %p66 = scmp.eq.s32.totalorder %s24, 1
      %p67 = por %p65, %p66
      %p68 = scmp.ne.s32.totalorder %s60, %s63
      %p69 = scmp.eq.s32.totalorder %s24, 0
      %p70 = por %p68, %p69
      %p71 = scmp.ne.s32.totalorder %s60, %s63
      %p72 = scmp.eq.s32.totalorder %s29, 1
      %p73 = por %p71, %p72
      %p74 = scmp.ne.s32.totalorder %s63, %s64
      %p75 = scmp.eq.s32.totalorder %s29, 0
      %p76 = por %p74, %p75
      %p77 = scmp.ne.s32.totalorder %s63, %s64
      %p78 = scmp.eq.s32.totalorder %s30, 1
      %p79 = por %p77, %p78
      %p81 = scmp.ne.s32.totalorder %s64, %s80
      %p82 = scmp.eq.s32.totalorder %s30, 0
      %p83 = por %p81, %p82
      %s84 = ssub.s32 %s24, %s31
      %p85 = scmp.eq.s32.totalorder %s84, 0
      %s87 = sadd.s32 %s86, 1
      %s88 = scalar_select %p85, %s86, %s87
      %p91 = pneg %p85
      %p92 = scmp.eq.s32.totalorder %s24, 1
      %p93 = por %p91, %p92
      %p94 = scmp.ne.s32.totalorder %s86, %s89
      %p95 = scmp.eq.s32.totalorder %s24, 0
      %p96 = por %p94, %p95
      %p97 = scmp.ne.s32.totalorder %s86, %s89
      %p98 = scmp.eq.s32.totalorder %s29, 1
      %p99 = por %p97, %p98
      %p100 = scmp.ne.s32.totalorder %s89, %s90
      %p101 = scmp.eq.s32.totalorder %s29, 0
      %p102 = por %p100, %p101
      %p103 = scmp.ne.s32.totalorder %s89, %s90
      %p104 = scmp.eq.s32.totalorder %s30, 1
      %p105 = por %p103, %p104
      %p107 = scmp.ne.s32.totalorder %s90, %s106
      %p108 = scmp.eq.s32.totalorder %s30, 0
      %p109 = por %p107, %p108
      %s111 = sadd.s32 %s110, 1
      %p114 = scmp.eq.s32.totalorder %s24, 1
      %p115 = scmp.ne.s32.totalorder %s110, %s112
      %p116 = scmp.eq.s32.totalorder %s24, 0
      %p117 = por %p115, %p116
      %p118 = scmp.ne.s32.totalorder %s110, %s112
      %p119 = scmp.eq.s32.totalorder %s29, 1
      %p120 = por %p118, %p119
      %p121 = scmp.ne.s32.totalorder %s112, %s113
      %p122 = scmp.eq.s32.totalorder %s29, 0
      %p123 = por %p121, %p122
      %p124 = scmp.ne.s32.totalorder %s112, %s113
      %p125 = scmp.eq.s32.totalorder %s30, 1
      %p126 = por %p124, %p125
      %p128 = scmp.ne.s32.totalorder %s113, %s127
      %p129 = scmp.eq.s32.totalorder %s30, 0
      %p130 = por %p128, %p129
      %s132 = sadd.s32 %s131, 1
      %p135 = scmp.eq.s32.totalorder %s24, 1
      %p136 = scmp.ne.s32.totalorder %s131, %s133
      %p137 = scmp.eq.s32.totalorder %s24, 0
      %p138 = por %p136, %p137
      %p139 = scmp.ne.s32.totalorder %s131, %s133
      %p140 = scmp.eq.s32.totalorder %s29, 1
      %p141 = por %p139, %p140
      %p142 = scmp.ne.s32.totalorder %s133, %s134
      %p143 = scmp.eq.s32.totalorder %s29, 0
      %p144 = por %p142, %p143
      %p145 = scmp.ne.s32.totalorder %s133, %s134
      %p146 = scmp.eq.s32.totalorder %s30, 1
      %p147 = por %p145, %p146
      %p149 = scmp.ne.s32.totalorder %s134, %s148
      %p150 = scmp.eq.s32.totalorder %s30, 0
      %p151 = por %p149, %p150
      %s153 = sadd.s32 %s152, 1
      %p156 = scmp.eq.s32.totalorder %s24, 1
      %p157 = scmp.ne.s32.totalorder %s152, %s154
      %p158 = scmp.eq.s32.totalorder %s24, 0
      %p159 = por %p157, %p158
      %p160 = scmp.ne.s32.totalorder %s152, %s154
      %p161 = scmp.eq.s32.totalorder %s29, 1
      %p162 = por %p160, %p161
      %p163 = scmp.ne.s32.totalorder %s154, %s155
      %p164 = scmp.eq.s32.totalorder %s29, 0
      %p165 = por %p163, %p164
      %p166 = scmp.ne.s32.totalorder %s154, %s155
      %p167 = scmp.eq.s32.totalorder %s30, 1
      %p168 = por %p166, %p167
      %p170 = scmp.ne.s32.totalorder %s155, %s169
      %p171 = scmp.eq.s32.totalorder %s30, 0
      %p172 = por %p170, %p171
      %s174 = sadd.s32 %s173, 1
      %p177 = scmp.eq.s32.totalorder %s24, 1
      %p178 = scmp.ne.s32.totalorder %s173, %s175
      %p179 = scmp.eq.s32.totalorder %s24, 0
      %p180 = por %p178, %p179
      %p181 = scmp.ne.s32.totalorder %s173, %s175
      %p182 = scmp.eq.s32.totalorder %s29, 1
      %p183 = por %p181, %p182
      %p184 = scmp.ne.s32.totalorder %s175, %s176
      %p185 = scmp.eq.s32.totalorder %s29, 0
      %p186 = por %p184, %p185
      %p187 = scmp.ne.s32.totalorder %s175, %s176
      %p188 = scmp.eq.s32.totalorder %s30, 1
      %p189 = por %p187, %p188
      %p191 = scmp.ne.s32.totalorder %s176, %s190
      %p192 = scmp.eq.s32.totalorder %s30, 0
      %p193 = por %p191, %p192
      %s194 = ssub.s32 %s24, %s31
      %p195 = scmp.eq.s32.totalorder %s194, 0
      %s197 = sadd.s32 %s196, 1
      %s198 = scalar_select %p195, %s196, %s197
      %p201 = pneg %p195
      %p202 = scmp.eq.s32.totalorder %s24, 1
      %p203 = por %p201, %p202
      %p204 = scmp.ne.s32.totalorder %s196, %s199
      %p205 = scmp.eq.s32.totalorder %s24, 0
      %p206 = por %p204, %p205
      %p207 = scmp.ne.s32.totalorder %s196, %s199
      %p208 = scmp.eq.s32.totalorder %s29, 1
      %p209 = por %p207, %p208
      %p210 = scmp.ne.s32.totalorder %s199, %s200
      %p211 = scmp.eq.s32.totalorder %s29, 0
      %p212 = por %p210, %p211
      %p213 = scmp.ne.s32.totalorder %s199, %s200
      %p214 = scmp.eq.s32.totalorder %s30, 1
      %p215 = por %p213, %p214
      %p217 = scmp.ne.s32.totalorder %s200, %s216
      %p218 = scmp.eq.s32.totalorder %s30, 0
      %p219 = por %p217, %p218
      %p220 = scmp.le.s32.totalorder 1, %s24
      %p221 = scmp.lt.s32.totalorder %s24, 3
      %p222 = pnand %p220, %p221
      %p223 = pneg %p222
      // Predicated region
      $region9: #{tpu_custom_call.1} parent=5 // pred_check
        _
      $region10: #{tpu_custom_call.1} parent=5 // pred_check_branch
        %225 = sbr.rel (%p222) target = $region12
      $region11: #{tpu_custom_call.1} parent=5 // pred_region
        %s226 = ssub.s32 %s24, 1
        // Predicated region
        $region13: #{tpu_custom_call.1} parent=11 // pred_check
          %p227 = pneg %p123
        $region14: #{tpu_custom_call.1} parent=11 // pred_check_branch
          %229 = sbr.rel (%p227) target = $region16
        $region15: #{tpu_custom_call.1} parent=11 // pred_region
          %s231 = ssub.s32 8192, 8192
          %232 = vsyncadd [#allocation9], %s231
          %s233 = sshll.u32 [#allocation8], 4
          %s234 = int_to_ptr.vmem [resolvable:$true] %s233
          %239 = dma.hbm_to_vmem [thread:$0]  %s3, 8192, %s234, [#allocation9], 128, 128, 8
        $region16: #{tpu_custom_call.1} parent=11 // pred_fallthru
          _
        // Predicated region
        $region17: #{tpu_custom_call.1} parent=11 // pred_check
          %p240 = pneg %p144
        $region18: #{tpu_custom_call.1} parent=11 // pred_check_branch
          %242 = sbr.rel (%p240) target = $region20
        $region19: #{tpu_custom_call.1} parent=11 // pred_region
          %s244 = ssub.s32 8192, 8192
          %245 = vsyncadd [#allocation9], %s244
          %s246 = sshll.u32 [#allocation10], 4
          %s247 = int_to_ptr.vmem [resolvable:$true] %s246
          %252 = dma.hbm_to_vmem [thread:$0]  %s4, 8192, %s247, [#allocation9], 128, 128, 8
        $region20: #{tpu_custom_call.1} parent=11 // pred_fallthru
          _
        // Predicated region
        $region21: #{tpu_custom_call.1} parent=11 // pred_check
          %p253 = pneg %p165
        $region22: #{tpu_custom_call.1} parent=11 // pred_check_branch
          %255 = sbr.rel (%p253) target = $region24
        $region23: #{tpu_custom_call.1} parent=11 // pred_region
          %s257 = ssub.s32 8192, 8192
          %258 = vsyncadd [#allocation12], %s257
          %s259 = sshll.u32 [#allocation11], 4
          %s260 = int_to_ptr.vmem [resolvable:$true] %s259
          %265 = dma.hbm_to_vmem [thread:$0]  %s5, 8192, %s260, [#allocation12], 128, 128, 8
        $region24: #{tpu_custom_call.1} parent=11 // pred_fallthru
          _
        // Predicated region
        $region25: #{tpu_custom_call.1} parent=11 // pred_check
          %p266 = pneg %p186
        $region26: #{tpu_custom_call.1} parent=11 // pred_check_branch
          %268 = sbr.rel (%p266) target = $region28
        $region27: #{tpu_custom_call.1} parent=11 // pred_region
          %s270 = ssub.s32 8192, 8192
          %271 = vsyncadd [#allocation12], %s270
          %s272 = sshll.u32 [#allocation13], 4
          %s273 = int_to_ptr.vmem [resolvable:$true] %s272
          %278 = dma.hbm_to_vmem [thread:$0]  %s6, 8192, %s273, [#allocation12], 128, 128, 8
        $region28: #{tpu_custom_call.1} parent=11 // pred_fallthru
          _
      $region12: #{tpu_custom_call.1} parent=5 // pred_fallthru
        _
      %p279 = scmp.lt.s32.totalorder %s24, 2
      // Predicated region
      $region29: #{tpu_custom_call.1} parent=5 // pred_check
        %p280 = pneg %p279
      $region30: #{tpu_custom_call.1} parent=5 // pred_check_branch
        %282 = sbr.rel (%p280) target = $region32
      $region31: #{tpu_custom_call.1} parent=5 // pred_region
        // Predicated region
        $region33: #{tpu_custom_call.1} parent=31 // pred_check
          %p283 = pneg %p44
        $region34: #{tpu_custom_call.1} parent=31 // pred_check_branch
          %285 = sbr.rel (%p283) target = $region36
        $region35: #{tpu_custom_call.1} parent=31 // pred_region
          %s286 = sand.u32 %s34, 1
          %s287 = scalar_lea.sflag [#allocation3], %s286
          %s288 = sand.u32 %s34, 1
          %s289 = smul.addr %s288, 8
          %s290 = scalar_lea.vmem [#allocation2], %s289
          %s292 = ssub.s32 128, 128
          %293 = vsyncadd %s287, %s292
          %s294 = smul.addr %s24, 128
          %s295 = scalar_lea.hbm %s0, %s294
          %s297 = sshll.u32 %s290, 4
          %s298 = int_to_ptr.vmem [resolvable:$true] %s297
          %300 = dma.hbm_to_vmem [thread:$0]  %s295, 128, %s298, %s287
        $region36: #{tpu_custom_call.1} parent=31 // pred_fallthru
          _
        // Predicated region
        $region37: #{tpu_custom_call.1} parent=31 // pred_check
          %p301 = pneg %p70
        $region38: #{tpu_custom_call.1} parent=31 // pred_check_branch
          %303 = sbr.rel (%p301) target = $region40
        $region39: #{tpu_custom_call.1} parent=31 // pred_region
          %s304 = sand.u32 %s24, 1
          %s305 = scalar_lea.sflag [#allocation6], %s304
          %s306 = sand.u32 %s60, 1
          %s307 = smul.addr %s306, 8
          %s308 = scalar_lea.vmem [#allocation5], %s307
          %s310 = ssub.s32 128, 128
          %311 = vsyncadd %s305, %s310
          %s312 = smul.addr %s24, 128
          %s313 = scalar_lea.hbm %s1, %s312
          %s315 = sshll.u32 %s308, 4
          %s316 = int_to_ptr.vmem [resolvable:$true] %s315
          %318 = dma.hbm_to_vmem [thread:$0]  %s313, 128, %s316, %s305
        $region40: #{tpu_custom_call.1} parent=31 // pred_fallthru
          _
        // Predicated region
        $region41: #{tpu_custom_call.1} parent=31 // pred_check
          %p319 = pneg %p96
        $region42: #{tpu_custom_call.1} parent=31 // pred_check_branch
          %321 = sbr.rel (%p319) target = $region44
        $region43: #{tpu_custom_call.1} parent=31 // pred_region
          %s322 = sand.u32 %s24, 1
          %s323 = scalar_lea.sflag [#allocation6], %s322
          %s324 = sand.u32 %s86, 1
          %s325 = smul.addr %s324, 8
          %s326 = scalar_lea.vmem [#allocation7], %s325
          %s328 = ssub.s32 128, 128
          %329 = vsyncadd %s323, %s328
          %s330 = smul.addr %s24, 128
          %s331 = scalar_lea.hbm %s2, %s330
          %s333 = sshll.u32 %s326, 4
          %s334 = int_to_ptr.vmem [resolvable:$true] %s333
          %336 = dma.hbm_to_vmem [thread:$0]  %s331, 128, %s334, %s323
        $region44: #{tpu_custom_call.1} parent=31 // pred_fallthru
          _
      $region32: #{tpu_custom_call.1} parent=5 // pred_fallthru
        _
      %p337 = scmp.le.s32.totalorder 1, %s24
      %p338 = scmp.lt.s32.totalorder %s24, 3
      %p339 = pnand %p337, %p338
      %p340 = pneg %p339
      // Predicated region
      $region45: #{tpu_custom_call.1} parent=5 // pred_check
        _
      $region46: #{tpu_custom_call.1} parent=5 // pred_check_branch
        %342 = sbr.rel (%p339) target = $region48
      $region47: #{tpu_custom_call.1} parent=5 // pred_region
        %s343 = ssub.s32 %s24, 1
        %s344 = sand.u32 %s37, 1
        %s345 = scalar_lea.sflag [#allocation3], %s344
        %s346 = sand.u32 %s37, 1
        %s347 = smul.addr %s346, 8
        %s348 = scalar_lea.vmem [#allocation2], %s347
        // Predicated region
        $region49: #{tpu_custom_call.1} parent=47 // pred_check
          %p349 = pneg %p50
        $region50: #{tpu_custom_call.1} parent=47 // pred_check_branch
          %351 = sbr.rel (%p349) target = $region52
        $region51: #{tpu_custom_call.1} parent=47 // pred_region
          %352 = dma.done %s345, 128
        $region52: #{tpu_custom_call.1} parent=47 // pred_fallthru
          _
        %s353 = sand.u32 %s29, 1
        %s354 = scalar_lea.sflag [#allocation6], %s353
        %s355 = sand.u32 %s63, 1
        %s356 = smul.addr %s355, 8
        %s357 = scalar_lea.vmem [#allocation5], %s356
        // Predicated region
        $region53: #{tpu_custom_call.1} parent=47 // pred_check
          %p358 = pneg %p76
        $region54: #{tpu_custom_call.1} parent=47 // pred_check_branch
          %360 = sbr.rel (%p358) target = $region56
        $region55: #{tpu_custom_call.1} parent=47 // pred_region
          %361 = dma.done %s354, 128
        $region56: #{tpu_custom_call.1} parent=47 // pred_fallthru
          _
        %s362 = sand.u32 %s29, 1
        %s363 = scalar_lea.sflag [#allocation6], %s362
        %s364 = sand.u32 %s89, 1
        %s365 = smul.addr %s364, 8
        %s366 = scalar_lea.vmem [#allocation7], %s365
        // Predicated region
        $region57: #{tpu_custom_call.1} parent=47 // pred_check
          %p367 = pneg %p102
        $region58: #{tpu_custom_call.1} parent=47 // pred_check_branch
          %369 = sbr.rel (%p367) target = $region60
        $region59: #{tpu_custom_call.1} parent=47 // pred_region
          %370 = dma.done %s363, 128
        $region60: #{tpu_custom_call.1} parent=47 // pred_fallthru
          _
        // Predicated region
        $region61: #{tpu_custom_call.1} parent=47 // pred_check
          %p371 = pneg %p123
        $region62: #{tpu_custom_call.1} parent=47 // pred_check_branch
          %373 = sbr.rel (%p371) target = $region64
        $region63: #{tpu_custom_call.1} parent=47 // pred_region
          %374 = dma.done [#allocation9], 8192
        $region64: #{tpu_custom_call.1} parent=47 // pred_fallthru
          _
        // Predicated region
        $region65: #{tpu_custom_call.1} parent=47 // pred_check
          %p375 = pneg %p144
        $region66: #{tpu_custom_call.1} parent=47 // pred_check_branch
          %377 = sbr.rel (%p375) target = $region68
        $region67: #{tpu_custom_call.1} parent=47 // pred_region
          %378 = dma.done [#allocation9], 8192
        $region68: #{tpu_custom_call.1} parent=47 // pred_fallthru
          _
        // Predicated region
        $region69: #{tpu_custom_call.1} parent=47 // pred_check
          %p379 = pneg %p165
        $region70: #{tpu_custom_call.1} parent=47 // pred_check_branch
          %381 = sbr.rel (%p379) target = $region72
        $region71: #{tpu_custom_call.1} parent=47 // pred_region
          %382 = dma.done [#allocation12], 8192
        $region72: #{tpu_custom_call.1} parent=47 // pred_fallthru
          _
        // Predicated region
        $region73: #{tpu_custom_call.1} parent=47 // pred_check
          %p383 = pneg %p186
        $region74: #{tpu_custom_call.1} parent=47 // pred_check_branch
          %385 = sbr.rel (%p383) target = $region76
        $region75: #{tpu_custom_call.1} parent=47 // pred_region
          %386 = dma.done [#allocation12], 8192
        $region76: #{tpu_custom_call.1} parent=47 // pred_fallthru
          _
        %s387 = sand.u32 %s37, 1
        %s388 = scalar_lea.sflag [#allocation3], %s387
        %s389 = sand.u32 %s37, 1
        %s390 = smul.addr %s389, 8
        %s391 = scalar_lea.vmem [#allocation2], %s390
        %p392 = pneg %p50
        %p393 = pneg %p47
        %s394 = sand.u32 %s29, 1
        %s395 = scalar_lea.sflag [#allocation6], %s394
        %s396 = sand.u32 %s63, 1
        %s397 = smul.addr %s396, 8
        %s398 = scalar_lea.vmem [#allocation5], %s397
        %p399 = pneg %p76
        %p400 = pneg %p73
        %s401 = sand.u32 %s29, 1
        %s402 = scalar_lea.sflag [#allocation6], %s401
        %s403 = sand.u32 %s89, 1
        %s404 = smul.addr %s403, 8
        %s405 = scalar_lea.vmem [#allocation7], %s404
        %p406 = pneg %p102
        %p407 = pneg %p99
        %p408 = pneg %p123
        %p409 = pneg %p120
        %p410 = pneg %p144
        %p411 = pneg %p141
        %p412 = pneg %p165
        %p413 = pneg %p162
        %p414 = pneg %p186
        %p415 = pneg %p183
        %p416 = pneg %p212
        %p417 = pneg %p209
        %s418 = sand.u32 %s199, 1
        %s419 = scalar_lea.sflag [#allocation4], %s418
        %s420 = sand.u32 %s199, 1
        %s421 = smul.addr %s420, 8
        %s422 = scalar_lea.vmem [#allocation14], %s421
        %v423 = vld [vmem:[%s348] sm:$0xff]
        %v424 = vld [vmem:[%s357] sm:$0xff]
        %v425 = vld [vmem:[%s366] sm:$0xff]
        %v426 = vld [vmem:[#allocation8] sm:$0xff]
        %v427 = vld [vmem:[#allocation8 + $0x8] sm:$0xff]
        %v428 = vld [vmem:[#allocation8 + $0x10] sm:$0xff]
        %v429 = vld [vmem:[#allocation8 + $0x18] sm:$0xff]
        %v430 = vld [vmem:[#allocation8 + $0x20] sm:$0xff]
        %v431 = vld [vmem:[#allocation8 + $0x28] sm:$0xff]
        %v432 = vld [vmem:[#allocation8 + $0x30] sm:$0xff]
        %v433 = vld [vmem:[#allocation8 + $0x38] sm:$0xff]
        %v434 = vld [vmem:[#allocation8 + $0x40] sm:$0xff]
        %v435 = vld [vmem:[#allocation8 + $0x48] sm:$0xff]
        %v436 = vld [vmem:[#allocation8 + $0x50] sm:$0xff]
        %v437 = vld [vmem:[#allocation8 + $0x58] sm:$0xff]
        %v438 = vld [vmem:[#allocation8 + $0x60] sm:$0xff]
        %v439 = vld [vmem:[#allocation8 + $0x68] sm:$0xff]
        %v440 = vld [vmem:[#allocation8 + $0x70] sm:$0xff]
        %v441 = vld [vmem:[#allocation8 + $0x78] sm:$0xff]
        %v442 = vld [vmem:[#allocation10] sm:$0xff]
        %v443 = vld [vmem:[#allocation10 + $0x8] sm:$0xff]
        %v444 = vld [vmem:[#allocation10 + $0x10] sm:$0xff]
        %v445 = vld [vmem:[#allocation10 + $0x18] sm:$0xff]
        %v446 = vld [vmem:[#allocation10 + $0x20] sm:$0xff]
        %v447 = vld [vmem:[#allocation10 + $0x28] sm:$0xff]
        %v448 = vld [vmem:[#allocation10 + $0x30] sm:$0xff]
        %v449 = vld [vmem:[#allocation10 + $0x38] sm:$0xff]
        %v450 = vld [vmem:[#allocation10 + $0x40] sm:$0xff]
        %v451 = vld [vmem:[#allocation10 + $0x48] sm:$0xff]
        %v452 = vld [vmem:[#allocation10 + $0x50] sm:$0xff]
        %v453 = vld [vmem:[#allocation10 + $0x58] sm:$0xff]
        %v454 = vld [vmem:[#allocation10 + $0x60] sm:$0xff]
        %v455 = vld [vmem:[#allocation10 + $0x68] sm:$0xff]
        %v456 = vld [vmem:[#allocation10 + $0x70] sm:$0xff]
        %v457 = vld [vmem:[#allocation10 + $0x78] sm:$0xff]
        %v458 = vld [vmem:[#allocation11] sm:$0xff]
        %v459 = vld [vmem:[#allocation11 + $0x8] sm:$0xff]
        %v460 = vld [vmem:[#allocation11 + $0x10] sm:$0xff]
        %v461 = vld [vmem:[#allocation11 + $0x18] sm:$0xff]
        %v462 = vld [vmem:[#allocation11 + $0x20] sm:$0xff]
        %v463 = vld [vmem:[#allocation11 + $0x28] sm:$0xff]
        %v464 = vld [vmem:[#allocation11 + $0x30] sm:$0xff]
        %v465 = vld [vmem:[#allocation11 + $0x38] sm:$0xff]
        %v466 = vld [vmem:[#allocation11 + $0x40] sm:$0xff]
        %v467 = vld [vmem:[#allocation11 + $0x48] sm:$0xff]
        %v468 = vld [vmem:[#allocation11 + $0x50] sm:$0xff]
        %v469 = vld [vmem:[#allocation11 + $0x58] sm:$0xff]
        %v470 = vld [vmem:[#allocation11 + $0x60] sm:$0xff]
        %v471 = vld [vmem:[#allocation11 + $0x68] sm:$0xff]
        %v472 = vld [vmem:[#allocation11 + $0x70] sm:$0xff]
        %v473 = vld [vmem:[#allocation11 + $0x78] sm:$0xff]
        %v474 = vld [vmem:[#allocation13] sm:$0xff]
        %v475 = vld [vmem:[#allocation13 + $0x8] sm:$0xff]
        %v476 = vld [vmem:[#allocation13 + $0x10] sm:$0xff]
        %v477 = vld [vmem:[#allocation13 + $0x18] sm:$0xff]
        %v478 = vld [vmem:[#allocation13 + $0x20] sm:$0xff]
        %v479 = vld [vmem:[#allocation13 + $0x28] sm:$0xff]
        %v480 = vld [vmem:[#allocation13 + $0x30] sm:$0xff]
        %v481 = vld [vmem:[#allocation13 + $0x38] sm:$0xff]
        %v482 = vld [vmem:[#allocation13 + $0x40] sm:$0xff]
        %v483 = vld [vmem:[#allocation13 + $0x48] sm:$0xff]
        %v484 = vld [vmem:[#allocation13 + $0x50] sm:$0xff]
        %v485 = vld [vmem:[#allocation13 + $0x58] sm:$0xff]
        %v486 = vld [vmem:[#allocation13 + $0x60] sm:$0xff]
        %v487 = vld [vmem:[#allocation13 + $0x68] sm:$0xff]
        %v488 = vld [vmem:[#allocation13 + $0x70] sm:$0xff]
        %v489 = vld [vmem:[#allocation13 + $0x78] sm:$0xff]
        %490 = vmatprep.subr.mxu0 0.0
        %491 = vmatpush1.msra.mxu0 %v426
        %492 = vmatprep.subr.mxu0 0.0
        %493 = vmatpush1.msra.mxu0 %v427
        %494 = vmatprep.subr.mxu0 0.0
        %495 = vmatpush1.msra.mxu0 %v428
        %496 = vmatprep.subr.mxu0 0.0
        %497 = vmatpush1.msra.mxu0 %v429
        %498 = vmatprep.subr.mxu0 0.0
        %499 = vmatpush1.msra.mxu0 %v430
        %500 = vmatprep.subr.mxu0 0.0
        %501 = vmatpush1.msra.mxu0 %v431
        %502 = vmatprep.subr.mxu0 0.0
        %503 = vmatpush1.msra.mxu0 %v432
        %504 = vmatprep.subr.mxu0 0.0
        %505 = vmatpush1.msra.mxu0 %v433
        %506 = vmatprep.subr.mxu0 0.0
        %507 = vmatpush1.msra.mxu0 %v434
        %508 = vmatprep.subr.mxu0 0.0
        %509 = vmatpush1.msra.mxu0 %v435
        %510 = vmatprep.subr.mxu0 0.0
        %511 = vmatpush1.msra.mxu0 %v436
        %512 = vmatprep.subr.mxu0 0.0
        %513 = vmatpush1.msra.mxu0 %v437
        %514 = vmatprep.subr.mxu0 0.0
        %515 = vmatpush1.msra.mxu0 %v438
        %516 = vmatprep.subr.mxu0 0.0
        %517 = vmatpush1.msra.mxu0 %v439
        %518 = vmatprep.subr.mxu0 0.0
        %519 = vmatpush1.msra.mxu0 %v440
        %520 = vmatprep.subr.mxu0 0.0
        %521 = vmatpush1.msra.mxu0 %v441
        %522 = vmatprep.subr.mxu0 0.0
        %523 = vmatpush1.msra.mxu0 0.0
        %524 = vmatprep.subr.mxu0 0.0
        %525 = vmatpush1.msra.mxu0 0.0
        %526 = vmatprep.subr.mxu0 0.0
        %527 = vmatpush1.msra.mxu0 0.0
        %528 = vmatprep.subr.mxu0 0.0
        %529 = vmatpush1.msra.mxu0 0.0
        %530 = vmatprep.subr.mxu0 0.0
        %531 = vmatpush1.msra.mxu0 0.0
        %532 = vmatprep.subr.mxu0 0.0
        %533 = vmatpush1.msra.mxu0 0.0
        %534 = vmatprep.subr.mxu0 0.0
        %535 = vmatpush1.msra.mxu0 0.0
        %536 = vmatprep.subr.mxu0 0.0
        %537 = vmatpush1.msra.mxu0 0.0
        %538 = vmatprep.subr.mxu0 0.0
        %539 = vmatpush1.msra.mxu0 0.0
        %540 = vmatprep.subr.mxu0 0.0
        %541 = vmatpush1.msra.mxu0 0.0
        %542 = vmatprep.subr.mxu0 0.0
        %543 = vmatpush1.msra.mxu0 0.0
        %544 = vmatprep.subr.mxu0 0.0
        %545 = vmatpush1.msra.mxu0 0.0
        %546 = vmatprep.subr.mxu0 0.0
        %547 = vmatpush1.msra.mxu0 0.0
        %548 = vmatprep.subr.mxu0 0.0
        %549 = vmatpush1.msra.mxu0 0.0
        %550 = vmatprep.subr.mxu0 0.0
        %551 = vmatpush1.msra.mxu0 0.0
        %552 = vmatprep.subr.mxu0 0.0
        %553 = vmatpush1.msra.mxu0 0.0
        %554 = vmatprep.mubr.f32.mxu0 0.0
        %555 = vmatmul.mubr.f32.gmra.mrb[0].mxu0 %v423
        %v556 = vpop.f32.mrb[0].mxu0
        %v557 = vadd.f32 0.0, %v556
        %v558 = vpop.f32.mrb[0].mxu0
        %559 = vdwg.mxu0
        %560 = vmatprep.subr.mxu0 0.0
        %561 = vmatpush1.msra.mxu0 %v442
        %562 = vmatprep.subr.mxu0 0.0
        %563 = vmatpush1.msra.mxu0 %v443
        %564 = vmatprep.subr.mxu0 0.0
        %565 = vmatpush1.msra.mxu0 %v444
        %566 = vmatprep.subr.mxu0 0.0
        %567 = vmatpush1.msra.mxu0 %v445
        %568 = vmatprep.subr.mxu0 0.0
        %569 = vmatpush1.msra.mxu0 %v446
        %570 = vmatprep.subr.mxu0 0.0
        %571 = vmatpush1.msra.mxu0 %v447
        %572 = vmatprep.subr.mxu0 0.0
        %573 = vmatpush1.msra.mxu0 %v448
        %574 = vmatprep.subr.mxu0 0.0
        %575 = vmatpush1.msra.mxu0 %v449
        %576 = vmatprep.subr.mxu0 0.0
        %577 = vmatpush1.msra.mxu0 %v450
        %578 = vmatprep.subr.mxu0 0.0
        %579 = vmatpush1.msra.mxu0 %v451
        %580 = vmatprep.subr.mxu0 0.0
        %581 = vmatpush1.msra.mxu0 %v452
        %582 = vmatprep.subr.mxu0 0.0
        %583 = vmatpush1.msra.mxu0 %v453
        %584 = vmatprep.subr.mxu0 0.0
        %585 = vmatpush1.msra.mxu0 %v454
        %586 = vmatprep.subr.mxu0 0.0
        %587 = vmatpush1.msra.mxu0 %v455
        %588 = vmatprep.subr.mxu0 0.0
        %589 = vmatpush1.msra.mxu0 %v456
        %590 = vmatprep.subr.mxu0 0.0
        %591 = vmatpush1.msra.mxu0 %v457
        %592 = vmatprep.subr.mxu0 0.0
        %593 = vmatpush1.msra.mxu0 0.0
        %594 = vmatprep.subr.mxu0 0.0
        %595 = vmatpush1.msra.mxu0 0.0
        %596 = vmatprep.subr.mxu0 0.0
        %597 = vmatpush1.msra.mxu0 0.0
        %598 = vmatprep.subr.mxu0 0.0
        %599 = vmatpush1.msra.mxu0 0.0
        %600 = vmatprep.subr.mxu0 0.0
        %601 = vmatpush1.msra.mxu0 0.0
        %602 = vmatprep.subr.mxu0 0.0
        %603 = vmatpush1.msra.mxu0 0.0
        %604 = vmatprep.subr.mxu0 0.0
        %605 = vmatpush1.msra.mxu0 0.0
        %606 = vmatprep.subr.mxu0 0.0
        %607 = vmatpush1.msra.mxu0 0.0
        %608 = vmatprep.subr.mxu0 0.0
        %609 = vmatpush1.msra.mxu0 0.0
        %610 = vmatprep.subr.mxu0 0.0
        %611 = vmatpush1.msra.mxu0 0.0
        %612 = vmatprep.subr.mxu0 0.0
        %613 = vmatpush1.msra.mxu0 0.0
        %614 = vmatprep.subr.mxu0 0.0
        %615 = vmatpush1.msra.mxu0 0.0
        %616 = vmatprep.subr.mxu0 0.0
        %617 = vmatpush1.msra.mxu0 0.0
        %618 = vmatprep.subr.mxu0 0.0
        %619 = vmatpush1.msra.mxu0 0.0
        %620 = vmatprep.subr.mxu0 0.0
        %621 = vmatpush1.msra.mxu0 0.0
        %622 = vmatprep.subr.mxu0 0.0
        %623 = vmatpush1.msra.mxu0 0.0
        %624 = vmatprep.mubr.f32.mxu0 0.0
        %625 = vmatmul.mubr.f32.gmra.mrb[0].mxu0 %v424
        %v626 = vpop.f32.mrb[0].mxu0
        %v627 = vadd.f32 0.0, %v626
        %v628 = vpop.f32.mrb[0].mxu0
        %629 = vdwg.mxu0
        %630 = vmatprep.subr.mxu0 0.0
        %631 = vmatpush1.msra.mxu0 %v458
        %632 = vmatprep.subr.mxu0 0.0
        %633 = vmatpush1.msra.mxu0 %v459
        %634 = vmatprep.subr.mxu0 0.0
        %635 = vmatpush1.msra.mxu0 %v460
        %636 = vmatprep.subr.mxu0 0.0
        %637 = vmatpush1.msra.mxu0 %v461
        %638 = vmatprep.subr.mxu0 0.0
        %639 = vmatpush1.msra.mxu0 %v462
        %640 = vmatprep.subr.mxu0 0.0
        %641 = vmatpush1.msra.mxu0 %v463
        %642 = vmatprep.subr.mxu0 0.0
        %643 = vmatpush1.msra.mxu0 %v464
        %644 = vmatprep.subr.mxu0 0.0
        %645 = vmatpush1.msra.mxu0 %v465
        %646 = vmatprep.subr.mxu0 0.0
        %647 = vmatpush1.msra.mxu0 %v466
        %648 = vmatprep.subr.mxu0 0.0
        %649 = vmatpush1.msra.mxu0 %v467
        %650 = vmatprep.subr.mxu0 0.0
        %651 = vmatpush1.msra.mxu0 %v468
        %652 = vmatprep.subr.mxu0 0.0
        %653 = vmatpush1.msra.mxu0 %v469
        %654 = vmatprep.subr.mxu0 0.0
        %655 = vmatpush1.msra.mxu0 %v470
        %656 = vmatprep.subr.mxu0 0.0
        %657 = vmatpush1.msra.mxu0 %v471
        %658 = vmatprep.subr.mxu0 0.0
        %659 = vmatpush1.msra.mxu0 %v472
        %660 = vmatprep.subr.mxu0 0.0
        %661 = vmatpush1.msra.mxu0 %v473
        %662 = vmatprep.subr.mxu0 0.0
        %663 = vmatpush1.msra.mxu0 0.0
        %664 = vmatprep.subr.mxu0 0.0
        %665 = vmatpush1.msra.mxu0 0.0
        %666 = vmatprep.subr.mxu0 0.0
        %667 = vmatpush1.msra.mxu0 0.0
        %668 = vmatprep.subr.mxu0 0.0
        %669 = vmatpush1.msra.mxu0 0.0
        %670 = vmatprep.subr.mxu0 0.0
        %671 = vmatpush1.msra.mxu0 0.0
        %672 = vmatprep.subr.mxu0 0.0
        %673 = vmatpush1.msra.mxu0 0.0
        %674 = vmatprep.subr.mxu0 0.0
        %675 = vmatpush1.msra.mxu0 0.0
        %676 = vmatprep.subr.mxu0 0.0
        %677 = vmatpush1.msra.mxu0 0.0
        %678 = vmatprep.subr.mxu0 0.0
        %679 = vmatpush1.msra.mxu0 0.0
        %680 = vmatprep.subr.mxu0 0.0
        %681 = vmatpush1.msra.mxu0 0.0
        %682 = vmatprep.subr.mxu0 0.0
        %683 = vmatpush1.msra.mxu0 0.0
        %684 = vmatprep.subr.mxu0 0.0
        %685 = vmatpush1.msra.mxu0 0.0
        %686 = vmatprep.subr.mxu0 0.0
        %687 = vmatpush1.msra.mxu0 0.0
        %688 = vmatprep.subr.mxu0 0.0
        %689 = vmatpush1.msra.mxu0 0.0
        %690 = vmatprep.subr.mxu0 0.0
        %691 = vmatpush1.msra.mxu0 0.0
        %692 = vmatprep.subr.mxu0 0.0
        %693 = vmatpush1.msra.mxu0 0.0
        %694 = vmatprep.mubr.f32.mxu0 0.0
        %695 = vmatmul.mubr.f32.gmra.mrb[0].mxu0 %v425
        %v696 = vpop.f32.mrb[0].mxu0
        %v697 = vadd.f32 0.0, %v696
        %v698 = vpop.f32.mrb[0].mxu0
        %699 = vdwg.mxu0
        %700 = vmatprep.subr.mxu0 0.0
        %701 = vmatpush1.xpose.msra.mxu0 %v627
        %702 = vmatprep.subr.mxu0 0.0
        %703 = vmatpush1.xpose.msra.mxu0 0.0
        %704 = vmatprep.subr.mxu0 0.0
        %705 = vmatpush1.xpose.msra.mxu0 0.0
        %706 = vmatprep.subr.mxu0 0.0
        %707 = vmatpush1.xpose.msra.mxu0 0.0
        %708 = vmatprep.subr.mxu0 0.0
        %709 = vmatpush1.xpose.msra.mxu0 0.0
        %710 = vmatprep.subr.mxu0 0.0
        %711 = vmatpush1.xpose.msra.mxu0 0.0
        %712 = vmatprep.subr.mxu0 0.0
        %713 = vmatpush1.xpose.msra.mxu0 0.0
        %714 = vmatprep.subr.mxu0 0.0
        %715 = vmatpush1.xpose.msra.mxu0 0.0
        %716 = vmatprep.subr.mxu0 0.0
        %717 = vmatpush1.xpose.msra.mxu0 0.0
        %718 = vmatprep.subr.mxu0 0.0
        %719 = vmatpush1.xpose.msra.mxu0 0.0
        %720 = vmatprep.subr.mxu0 0.0
        %721 = vmatpush1.xpose.msra.mxu0 0.0
        %722 = vmatprep.subr.mxu0 0.0
        %723 = vmatpush1.xpose.msra.mxu0 0.0
        %724 = vmatprep.subr.mxu0 0.0
        %725 = vmatpush1.xpose.msra.mxu0 0.0
        %726 = vmatprep.subr.mxu0 0.0
        %727 = vmatpush1.xpose.msra.mxu0 0.0
        %728 = vmatprep.subr.mxu0 0.0
        %729 = vmatpush1.xpose.msra.mxu0 0.0
        %730 = vmatprep.subr.mxu0 0.0
        %731 = vmatpush1.xpose.msra.mxu0 0.0
        %732 = vmatprep.subr.mxu0 0.0
        %733 = vmatpush1.xpose.msra.mxu0 0.0
        %734 = vmatprep.subr.mxu0 0.0
        %735 = vmatpush1.xpose.msra.mxu0 0.0
        %736 = vmatprep.subr.mxu0 0.0
        %737 = vmatpush1.xpose.msra.mxu0 0.0
        %738 = vmatprep.subr.mxu0 0.0
        %739 = vmatpush1.xpose.msra.mxu0 0.0
        %740 = vmatprep.subr.mxu0 0.0
        %741 = vmatpush1.xpose.msra.mxu0 0.0
        %742 = vmatprep.subr.mxu0 0.0
        %743 = vmatpush1.xpose.msra.mxu0 0.0
        %744 = vmatprep.subr.mxu0 0.0
        %745 = vmatpush1.xpose.msra.mxu0 0.0
        %746 = vmatprep.subr.mxu0 0.0
        %747 = vmatpush1.xpose.msra.mxu0 0.0
        %748 = vmatprep.subr.mxu0 0.0
        %749 = vmatpush1.xpose.msra.mxu0 0.0
        %750 = vmatprep.subr.mxu0 0.0
        %751 = vmatpush1.xpose.msra.mxu0 0.0
        %752 = vmatprep.subr.mxu0 0.0
        %753 = vmatpush1.xpose.msra.mxu0 0.0
        %754 = vmatprep.subr.mxu0 0.0
        %755 = vmatpush1.xpose.msra.mxu0 0.0
        %756 = vmatprep.subr.mxu0 0.0
        %757 = vmatpush1.xpose.msra.mxu0 0.0
        %758 = vmatprep.subr.mxu0 0.0
        %759 = vmatpush1.xpose.msra.mxu0 0.0
        %760 = vmatprep.subr.mxu0 0.0
        %761 = vmatpush1.xpose.msra.mxu0 0.0
        %762 = vmatprep.subr.mxu0 0.0
        %763 = vmatpush1.xpose.msra.mxu0 0.0
        %764 = vmatprep.mubr.f32.mxu0 0.0
        %765 = vmatmul.mubr.f32.gmra.mrb[0].mxu0 %v557
        %v766 = vpop.f32.mrb[0].mxu0
        %v767 = vadd.f32 0.0, %v766
        %v768 = vpop.f32.mrb[0].mxu0
        %769 = vdwg.mxu0
        %vm770 = vcmask 64512
        %v771 = vsel %vm770, %v767, -inf
        %772 = vmax.xlane.f32.xlu0 %v771
        %v773 = vpop.xlane.xlu0 %772
        %v774 = vsub.f32 %v767, %v773
        %v775 = vmul.f32 %v774, 1.442695
        %v776 = vpow.pop %v775
        %v777 = vsel %vm770, %v776, 0.0
        %778 = vadd.xlane.f32.xlu0 %v777
        %v779 = vpop.xlane.xlu0 %778
        %v780 = vrcp.pop %v779
        %v781 = vmul.f32 %v776, %v780
        %v783 = vsel %vm770, %v781, 0
        %785 = vmatprep.subr.mxu0 0.0
        %786 = vmatpush1.msra.mxu0 %v697
        %787 = vmatprep.subr.mxu0 0.0
        %788 = vmatpush1.msra.mxu0 0.0
        %789 = vmatprep.subr.mxu0 0.0
        %790 = vmatpush1.msra.mxu0 0.0
        %791 = vmatprep.subr.mxu0 0.0
        %792 = vmatpush1.msra.mxu0 0.0
        %793 = vmatprep.subr.mxu0 0.0
        %794 = vmatpush1.msra.mxu0 0.0
        %795 = vmatprep.subr.mxu0 0.0
        %796 = vmatpush1.msra.mxu0 0.0
        %797 = vmatprep.subr.mxu0 0.0
        %798 = vmatpush1.msra.mxu0 0.0
        %799 = vmatprep.subr.mxu0 0.0
        %800 = vmatpush1.msra.mxu0 0.0
        %801 = vmatprep.subr.mxu0 0.0
        %802 = vmatpush1.msra.mxu0 0.0
        %803 = vmatprep.subr.mxu0 0.0
        %804 = vmatpush1.msra.mxu0 0.0
        %805 = vmatprep.subr.mxu0 0.0
        %806 = vmatpush1.msra.mxu0 0.0
        %807 = vmatprep.subr.mxu0 0.0
        %808 = vmatpush1.msra.mxu0 0.0
        %809 = vmatprep.subr.mxu0 0.0
        %810 = vmatpush1.msra.mxu0 0.0
        %811 = vmatprep.subr.mxu0 0.0
        %812 = vmatpush1.msra.mxu0 0.0
        %813 = vmatprep.subr.mxu0 0.0
        %814 = vmatpush1.msra.mxu0 0.0
        %815 = vmatprep.subr.mxu0 0.0
        %816 = vmatpush1.msra.mxu0 0.0
        %817 = vmatprep.subr.mxu0 0.0
        %818 = vmatpush1.msra.mxu0 0.0
        %819 = vmatprep.subr.mxu0 0.0
        %820 = vmatpush1.msra.mxu0 0.0
        %821 = vmatprep.subr.mxu0 0.0
        %822 = vmatpush1.msra.mxu0 0.0
        %823 = vmatprep.subr.mxu0 0.0
        %824 = vmatpush1.msra.mxu0 0.0
        %825 = vmatprep.subr.mxu0 0.0
        %826 = vmatpush1.msra.mxu0 0.0
        %827 = vmatprep.subr.mxu0 0.0
        %828 = vmatpush1.msra.mxu0 0.0
        %829 = vmatprep.subr.mxu0 0.0
        %830 = vmatpush1.msra.mxu0 0.0
        %831 = vmatprep.subr.mxu0 0.0
        %832 = vmatpush1.msra.mxu0 0.0
        %833 = vmatprep.subr.mxu0 0.0
        %834 = vmatpush1.msra.mxu0 0.0
        %835 = vmatprep.subr.mxu0 0.0
        %836 = vmatpush1.msra.mxu0 0.0
        %837 = vmatprep.subr.mxu0 0.0
        %838 = vmatpush1.msra.mxu0 0.0
        %839 = vmatprep.subr.mxu0 0.0
        %840 = vmatpush1.msra.mxu0 0.0
        %841 = vmatprep.subr.mxu0 0.0
        %842 = vmatpush1.msra.mxu0 0.0
        %843 = vmatprep.subr.mxu0 0.0
        %844 = vmatpush1.msra.mxu0 0.0
        %845 = vmatprep.subr.mxu0 0.0
        %846 = vmatpush1.msra.mxu0 0.0
        %847 = vmatprep.subr.mxu0 0.0
        %848 = vmatpush1.msra.mxu0 0.0
        %849 = vmatprep.mubr.f32.mxu0 0.0
        %850 = vmatmul.mubr.f32.gmra.mrb[0].mxu0 %v783
        %v851 = vpop.f32.mrb[0].mxu0
        %v852 = vadd.f32 0.0, %v851
        %v853 = vpop.f32.mrb[0].mxu0
        %854 = vdwg.mxu0
        %s855 = scalar_lea.vmem [#allocation8], 128
        %v856 = vld [vmem:[%s855] sm:$0xff]
        %v857 = vld [vmem:[%s855 + $0x8] sm:$0xff]
        %v858 = vld [vmem:[%s855 + $0x10] sm:$0xff]
        %v859 = vld [vmem:[%s855 + $0x18] sm:$0xff]
        %v860 = vld [vmem:[%s855 + $0x20] sm:$0xff]
        %v861 = vld [vmem:[%s855 + $0x28] sm:$0xff]
        %v862 = vld [vmem:[%s855 + $0x30] sm:$0xff]
        %v863 = vld [vmem:[%s855 + $0x38] sm:$0xff]
        %v864 = vld [vmem:[%s855 + $0x40] sm:$0xff]
        %v865 = vld [vmem:[%s855 + $0x48] sm:$0xff]
        %v866 = vld [vmem:[%s855 + $0x50] sm:$0xff]
        %v867 = vld [vmem:[%s855 + $0x58] sm:$0xff]
        %v868 = vld [vmem:[%s855 + $0x60] sm:$0xff]
        %v869 = vld [vmem:[%s855 + $0x68] sm:$0xff]
        %v870 = vld [vmem:[%s855 + $0x70] sm:$0xff]
        %v871 = vld [vmem:[%s855 + $0x78] sm:$0xff]
        %s872 = scalar_lea.vmem [#allocation10], 128
        %v873 = vld [vmem:[%s872] sm:$0xff]
        %v874 = vld [vmem:[%s872 + $0x8] sm:$0xff]
        %v875 = vld [vmem:[%s872 + $0x10] sm:$0xff]
        %v876 = vld [vmem:[%s872 + $0x18] sm:$0xff]
        %v877 = vld [vmem:[%s872 + $0x20] sm:$0xff]
        %v878 = vld [vmem:[%s872 + $0x28] sm:$0xff]
        %v879 = vld [vmem:[%s872 + $0x30] sm:$0xff]
        %v880 = vld [vmem:[%s872 + $0x38] sm:$0xff]
        %v881 = vld [vmem:[%s872 + $0x40] sm:$0xff]
        %v882 = vld [vmem:[%s872 + $0x48] sm:$0xff]
        %v883 = vld [vmem:[%s872 + $0x50] sm:$0xff]
        %v884 = vld [vmem:[%s872 + $0x58] sm:$0xff]
        %v885 = vld [vmem:[%s872 + $0x60] sm:$0xff]
        %v886 = vld [vmem:[%s872 + $0x68] sm:$0xff]
        %v887 = vld [vmem:[%s872 + $0x70] sm:$0xff]
        %v888 = vld [vmem:[%s872 + $0x78] sm:$0xff]
        %s889 = scalar_lea.vmem [#allocation11], 128
        %v890 = vld [vmem:[%s889] sm:$0xff]
        %v891 = vld [vmem:[%s889 + $0x8] sm:$0xff]
        %v892 = vld [vmem:[%s889 + $0x10] sm:$0xff]
        %v893 = vld [vmem:[%s889 + $0x18] sm:$0xff]
        %v894 = vld [vmem:[%s889 + $0x20] sm:$0xff]
        %v895 = vld [vmem:[%s889 + $0x28] sm:$0xff]
        %v896 = vld [vmem:[%s889 + $0x30] sm:$0xff]
        %v897 = vld [vmem:[%s889 + $0x38] sm:$0xff]
        %v898 = vld [vmem:[%s889 + $0x40] sm:$0xff]
        %v899 = vld [vmem:[%s889 + $0x48] sm:$0xff]
        %v900 = vld [vmem:[%s889 + $0x50] sm:$0xff]
        %v901 = vld [vmem:[%s889 + $0x58] sm:$0xff]
        %v902 = vld [vmem:[%s889 + $0x60] sm:$0xff]
        %v903 = vld [vmem:[%s889 + $0x68] sm:$0xff]
        %v904 = vld [vmem:[%s889 + $0x70] sm:$0xff]
        %v905 = vld [vmem:[%s889 + $0x78] sm:$0xff]
        %s906 = scalar_lea.vmem [#allocation13], 128
        %v907 = vld [vmem:[%s906] sm:$0xff]
        %v908 = vld [vmem:[%s906 + $0x8] sm:$0xff]
        %v909 = vld [vmem:[%s906 + $0x10] sm:$0xff]
        %v910 = vld [vmem:[%s906 + $0x18] sm:$0xff]
        %v911 = vld [vmem:[%s906 + $0x20] sm:$0xff]
        %v912 = vld [vmem:[%s906 + $0x28] sm:$0xff]
        %v913 = vld [vmem:[%s906 + $0x30] sm:$0xff]
        %v914 = vld [vmem:[%s906 + $0x38] sm:$0xff]
        %v915 = vld [vmem:[%s906 + $0x40] sm:$0xff]
        %v916 = vld [vmem:[%s906 + $0x48] sm:$0xff]
        %v917 = vld [vmem:[%s906 + $0x50] sm:$0xff]
        %v918 = vld [vmem:[%s906 + $0x58] sm:$0xff]
        %v919 = vld [vmem:[%s906 + $0x60] sm:$0xff]
        %v920 = vld [vmem:[%s906 + $0x68] sm:$0xff]
        %v921 = vld [vmem:[%s906 + $0x70] sm:$0xff]
        %v922 = vld [vmem:[%s906 + $0x78] sm:$0xff]
        %923 = vmatprep.subr.mxu0 0.0
        %924 = vmatpush1.msra.mxu0 %v856
        %925 = vmatprep.subr.mxu0 0.0
        %926 = vmatpush1.msra.mxu0 %v857
        %927 = vmatprep.subr.mxu0 0.0
        %928 = vmatpush1.msra.mxu0 %v858
        %929 = vmatprep.subr.mxu0 0.0
        %930 = vmatpush1.msra.mxu0 %v859
        %931 = vmatprep.subr.mxu0 0.0
        %932 = vmatpush1.msra.mxu0 %v860
        %933 = vmatprep.subr.mxu0 0.0
        %934 = vmatpush1.msra.mxu0 %v861
        %935 = vmatprep.subr.mxu0 0.0
        %936 = vmatpush1.msra.mxu0 %v862
        %937 = vmatprep.subr.mxu0 0.0
        %938 = vmatpush1.msra.mxu0 %v863
        %939 = vmatprep.subr.mxu0 0.0
        %940 = vmatpush1.msra.mxu0 %v864
        %941 = vmatprep.subr.mxu0 0.0
        %942 = vmatpush1.msra.mxu0 %v865
        %943 = vmatprep.subr.mxu0 0.0
        %944 = vmatpush1.msra.mxu0 %v866
        %945 = vmatprep.subr.mxu0 0.0
        %946 = vmatpush1.msra.mxu0 %v867
        %947 = vmatprep.subr.mxu0 0.0
        %948 = vmatpush1.msra.mxu0 %v868
        %949 = vmatprep.subr.mxu0 0.0
        %950 = vmatpush1.msra.mxu0 %v869
        %951 = vmatprep.subr.mxu0 0.0
        %952 = vmatpush1.msra.mxu0 %v870
        %953 = vmatprep.subr.mxu0 0.0
        %954 = vmatpush1.msra.mxu0 %v871
        %955 = vmatprep.subr.mxu0 0.0
        %956 = vmatpush1.msra.mxu0 0.0
        %957 = vmatprep.subr.mxu0 0.0
        %958 = vmatpush1.msra.mxu0 0.0
        %959 = vmatprep.subr.mxu0 0.0
        %960 = vmatpush1.msra.mxu0 0.0
        %961 = vmatprep.subr.mxu0 0.0
        %962 = vmatpush1.msra.mxu0 0.0
        %963 = vmatprep.subr.mxu0 0.0
        %964 = vmatpush1.msra.mxu0 0.0
        %965 = vmatprep.subr.mxu0 0.0
        %966 = vmatpush1.msra.mxu0 0.0
        %967 = vmatprep.subr.mxu0 0.0
        %968 = vmatpush1.msra.mxu0 0.0
        %969 = vmatprep.subr.mxu0 0.0
        %970 = vmatpush1.msra.mxu0 0.0
        %971 = vmatprep.subr.mxu0 0.0
        %972 = vmatpush1.msra.mxu0 0.0
        %973 = vmatprep.subr.mxu0 0.0
        %974 = vmatpush1.msra.mxu0 0.0
        %975 = vmatprep.subr.mxu0 0.0
        %976 = vmatpush1.msra.mxu0 0.0
        %977 = vmatprep.subr.mxu0 0.0
        %978 = vmatpush1.msra.mxu0 0.0
        %979 = vmatprep.subr.mxu0 0.0
        %980 = vmatpush1.msra.mxu0 0.0
        %981 = vmatprep.subr.mxu0 0.0
        %982 = vmatpush1.msra.mxu0 0.0
        %983 = vmatprep.subr.mxu0 0.0
        %984 = vmatpush1.msra.mxu0 0.0
        %985 = vmatprep.subr.mxu0 0.0
        %986 = vmatpush1.msra.mxu0 0.0
        %987 = vmatprep.mubr.f32.mxu0 0.0
        %988 = vmatmul.mubr.f32.gmra.mrb[0].mxu0 %v423
        %v989 = vpop.f32.mrb[0].mxu0
        %v990 = vadd.f32 0.0, %v989
        %v991 = vpop.f32.mrb[0].mxu0
        %992 = vdwg.mxu0
        %993 = vmatprep.subr.mxu0 0.0
        %994 = vmatpush1.msra.mxu0 %v873
        %995 = vmatprep.subr.mxu0 0.0
        %996 = vmatpush1.msra.mxu0 %v874
        %997 = vmatprep.subr.mxu0 0.0
        %998 = vmatpush1.msra.mxu0 %v875
        %999 = vmatprep.subr.mxu0 0.0
        %1000 = vmatpush1.msra.mxu0 %v876
        %1001 = vmatprep.subr.mxu0 0.0
        %1002 = vmatpush1.msra.mxu0 %v877
        %1003 = vmatprep.subr.mxu0 0.0
        %1004 = vmatpush1.msra.mxu0 %v878
        %1005 = vmatprep.subr.mxu0 0.0
        %1006 = vmatpush1.msra.mxu0 %v879
        %1007 = vmatprep.subr.mxu0 0.0
        %1008 = vmatpush1.msra.mxu0 %v880
        %1009 = vmatprep.subr.mxu0 0.0
        %1010 = vmatpush1.msra.mxu0 %v881
        %1011 = vmatprep.subr.mxu0 0.0
        %1012 = vmatpush1.msra.mxu0 %v882
        %1013 = vmatprep.subr.mxu0 0.0
        %1014 = vmatpush1.msra.mxu0 %v883
        %1015 = vmatprep.subr.mxu0 0.0
        %1016 = vmatpush1.msra.mxu0 %v884
        %1017 = vmatprep.subr.mxu0 0.0
        %1018 = vmatpush1.msra.mxu0 %v885
        %1019 = vmatprep.subr.mxu0 0.0
        %1020 = vmatpush1.msra.mxu0 %v886
        %1021 = vmatprep.subr.mxu0 0.0
        %1022 = vmatpush1.msra.mxu0 %v887
        %1023 = vmatprep.subr.mxu0 0.0
        %1024 = vmatpush1.msra.mxu0 %v888
        %1025 = vmatprep.subr.mxu0 0.0
        %1026 = vmatpush1.msra.mxu0 0.0
        %1027 = vmatprep.subr.mxu0 0.0
        %1028 = vmatpush1.msra.mxu0 0.0
        %1029 = vmatprep.subr.mxu0 0.0
        %1030 = vmatpush1.msra.mxu0 0.0
        %1031 = vmatprep.subr.mxu0 0.0
        %1032 = vmatpush1.msra.mxu0 0.0
        %1033 = vmatprep.subr.mxu0 0.0
        %1034 = vmatpush1.msra.mxu0 0.0
        %1035 = vmatprep.subr.mxu0 0.0
        %1036 = vmatpush1.msra.mxu0 0.0
        %1037 = vmatprep.subr.mxu0 0.0
        %1038 = vmatpush1.msra.mxu0 0.0
        %1039 = vmatprep.subr.mxu0 0.0
        %1040 = vmatpush1.msra.mxu0 0.0
        %1041 = vmatprep.subr.mxu0 0.0
        %1042 = vmatpush1.msra.mxu0 0.0
        %1043 = vmatprep.subr.mxu0 0.0
        %1044 = vmatpush1.msra.mxu0 0.0
        %1045 = vmatprep.subr.mxu0 0.0
        %1046 = vmatpush1.msra.mxu0 0.0
        %1047 = vmatprep.subr.mxu0 0.0
        %1048 = vmatpush1.msra.mxu0 0.0
        %1049 = vmatprep.subr.mxu0 0.0
        %1050 = vmatpush1.msra.mxu0 0.0
        %1051 = vmatprep.subr.mxu0 0.0
        %1052 = vmatpush1.msra.mxu0 0.0
        %1053 = vmatprep.subr.mxu0 0.0
        %1054 = vmatpush1.msra.mxu0 0.0
        %1055 = vmatprep.subr.mxu0 0.0
        %1056 = vmatpush1.msra.mxu0 0.0
        %1057 = vmatprep.mubr.f32.mxu0 0.0
        %1058 = vmatmul.mubr.f32.gmra.mrb[0].mxu0 %v424
        %v1059 = vpop.f32.mrb[0].mxu0
        %v1060 = vadd.f32 0.0, %v1059
        %v1061 = vpop.f32.mrb[0].mxu0
        %1062 = vdwg.mxu0
        %1063 = vmatprep.subr.mxu0 0.0
        %1064 = vmatpush1.msra.mxu0 %v890
        %1065 = vmatprep.subr.mxu0 0.0
        %1066 = vmatpush1.msra.mxu0 %v891
        %1067 = vmatprep.subr.mxu0 0.0
        %1068 = vmatpush1.msra.mxu0 %v892
        %1069 = vmatprep.subr.mxu0 0.0
        %1070 = vmatpush1.msra.mxu0 %v893
        %1071 = vmatprep.subr.mxu0 0.0
        %1072 = vmatpush1.msra.mxu0 %v894
        %1073 = vmatprep.subr.mxu0 0.0
        %1074 = vmatpush1.msra.mxu0 %v895
        %1075 = vmatprep.subr.mxu0 0.0
        %1076 = vmatpush1.msra.mxu0 %v896
        %1077 = vmatprep.subr.mxu0 0.0
        %1078 = vmatpush1.msra.mxu0 %v897
        %1079 = vmatprep.subr.mxu0 0.0
        %1080 = vmatpush1.msra.mxu0 %v898
        %1081 = vmatprep.subr.mxu0 0.0
        %1082 = vmatpush1.msra.mxu0 %v899
        %1083 = vmatprep.subr.mxu0 0.0
        %1084 = vmatpush1.msra.mxu0 %v900
        %1085 = vmatprep.subr.mxu0 0.0
        %1086 = vmatpush1.msra.mxu0 %v901
        %1087 = vmatprep.subr.mxu0 0.0
        %1088 = vmatpush1.msra.mxu0 %v902
        %1089 = vmatprep.subr.mxu0 0.0
        %1090 = vmatpush1.msra.mxu0 %v903
        %1091 = vmatprep.subr.mxu0 0.0
        %1092 = vmatpush1.msra.mxu0 %v904
        %1093 = vmatprep.subr.mxu0 0.0
        %1094 = vmatpush1.msra.mxu0 %v905
        %1095 = vmatprep.subr.mxu0 0.0
        %1096 = vmatpush1.msra.mxu0 0.0
        %1097 = vmatprep.subr.mxu0 0.0
        %1098 = vmatpush1.msra.mxu0 0.0
        %1099 = vmatprep.subr.mxu0 0.0
        %1100 = vmatpush1.msra.mxu0 0.0
        %1101 = vmatprep.subr.mxu0 0.0
        %1102 = vmatpush1.msra.mxu0 0.0
        %1103 = vmatprep.subr.mxu0 0.0
        %1104 = vmatpush1.msra.mxu0 0.0
        %1105 = vmatprep.subr.mxu0 0.0
        %1106 = vmatpush1.msra.mxu0 0.0
        %1107 = vmatprep.subr.mxu0 0.0
        %1108 = vmatpush1.msra.mxu0 0.0
        %1109 = vmatprep.subr.mxu0 0.0
        %1110 = vmatpush1.msra.mxu0 0.0
        %1111 = vmatprep.subr.mxu0 0.0
        %1112 = vmatpush1.msra.mxu0 0.0
        %1113 = vmatprep.subr.mxu0 0.0
        %1114 = vmatpush1.msra.mxu0 0.0
        %1115 = vmatprep.subr.mxu0 0.0
        %1116 = vmatpush1.msra.mxu0 0.0
        %1117 = vmatprep.subr.mxu0 0.0
        %1118 = vmatpush1.msra.mxu0 0.0
        %1119 = vmatprep.subr.mxu0 0.0
        %1120 = vmatpush1.msra.mxu0 0.0
        %1121 = vmatprep.subr.mxu0 0.0
        %1122 = vmatpush1.msra.mxu0 0.0
        %1123 = vmatprep.subr.mxu0 0.0
        %1124 = vmatpush1.msra.mxu0 0.0
        %1125 = vmatprep.subr.mxu0 0.0
        %1126 = vmatpush1.msra.mxu0 0.0
        %1127 = vmatprep.mubr.f32.mxu0 0.0
        %1128 = vmatmul.mubr.f32.gmra.mrb[0].mxu0 %v425
        %v1129 = vpop.f32.mrb[0].mxu0
        %v1130 = vadd.f32 0.0, %v1129
        %v1131 = vpop.f32.mrb[0].mxu0
        %1132 = vdwg.mxu0
        %1133 = vmatprep.subr.mxu0 0.0
        %1134 = vmatpush1.xpose.msra.mxu0 %v1060
        %1135 = vmatprep.subr.mxu0 0.0
        %1136 = vmatpush1.xpose.msra.mxu0 0.0
        %1137 = vmatprep.subr.mxu0 0.0
        %1138 = vmatpush1.xpose.msra.mxu0 0.0
        %1139 = vmatprep.subr.mxu0 0.0
        %1140 = vmatpush1.xpose.msra.mxu0 0.0
        %1141 = vmatprep.subr.mxu0 0.0
        %1142 = vmatpush1.xpose.msra.mxu0 0.0
        %1143 = vmatprep.subr.mxu0 0.0
        %1144 = vmatpush1.xpose.msra.mxu0 0.0
        %1145 = vmatprep.subr.mxu0 0.0
        %1146 = vmatpush1.xpose.msra.mxu0 0.0
        %1147 = vmatprep.subr.mxu0 0.0
        %1148 = vmatpush1.xpose.msra.mxu0 0.0
        %1149 = vmatprep.subr.mxu0 0.0
        %1150 = vmatpush1.xpose.msra.mxu0 0.0
        %1151 = vmatprep.subr.mxu0 0.0
        %1152 = vmatpush1.xpose.msra.mxu0 0.0
        %1153 = vmatprep.subr.mxu0 0.0
        %1154 = vmatpush1.xpose.msra.mxu0 0.0
        %1155 = vmatprep.subr.mxu0 0.0
        %1156 = vmatpush1.xpose.msra.mxu0 0.0
        %1157 = vmatprep.subr.mxu0 0.0
        %1158 = vmatpush1.xpose.msra.mxu0 0.0
        %1159 = vmatprep.subr.mxu0 0.0
        %1160 = vmatpush1.xpose.msra.mxu0 0.0
        %1161 = vmatprep.subr.mxu0 0.0
        %1162 = vmatpush1.xpose.msra.mxu0 0.0
        %1163 = vmatprep.subr.mxu0 0.0
        %1164 = vmatpush1.xpose.msra.mxu0 0.0
        %1165 = vmatprep.subr.mxu0 0.0
        %1166 = vmatpush1.xpose.msra.mxu0 0.0
        %1167 = vmatprep.subr.mxu0 0.0
        %1168 = vmatpush1.xpose.msra.mxu0 0.0
        %1169 = vmatprep.subr.mxu0 0.0
        %1170 = vmatpush1.xpose.msra.mxu0 0.0
        %1171 = vmatprep.subr.mxu0 0.0
        %1172 = vmatpush1.xpose.msra.mxu0 0.0
        %1173 = vmatprep.subr.mxu0 0.0
        %1174 = vmatpush1.xpose.msra.mxu0 0.0
        %1175 = vmatprep.subr.mxu0 0.0
        %1176 = vmatpush1.xpose.msra.mxu0 0.0
        %1177 = vmatprep.subr.mxu0 0.0
        %1178 = vmatpush1.xpose.msra.mxu0 0.0
        %1179 = vmatprep.subr.mxu0 0.0
        %1180 = vmatpush1.xpose.msra.mxu0 0.0
        %1181 = vmatprep.subr.mxu0 0.0
        %1182 = vmatpush1.xpose.msra.mxu0 0.0
        %1183 = vmatprep.subr.mxu0 0.0
        %1184 = vmatpush1.xpose.msra.mxu0 0.0
        %1185 = vmatprep.subr.mxu0 0.0
        %1186 = vmatpush1.xpose.msra.mxu0 0.0
        %1187 = vmatprep.subr.mxu0 0.0
        %1188 = vmatpush1.xpose.msra.mxu0 0.0
        %1189 = vmatprep.subr.mxu0 0.0
        %1190 = vmatpush1.xpose.msra.mxu0 0.0
        %1191 = vmatprep.subr.mxu0 0.0
        %1192 = vmatpush1.xpose.msra.mxu0 0.0
        %1193 = vmatprep.subr.mxu0 0.0
        %1194 = vmatpush1.xpose.msra.mxu0 0.0
        %1195 = vmatprep.subr.mxu0 0.0
        %1196 = vmatpush1.xpose.msra.mxu0 0.0
        %1197 = vmatprep.mubr.f32.mxu0 0.0
        %1198 = vmatmul.mubr.f32.gmra.mrb[0].mxu0 %v990
        %v1199 = vpop.f32.mrb[0].mxu0
        %v1200 = vadd.f32 0.0, %v1199
        %v1201 = vpop.f32.mrb[0].mxu0
        %1202 = vdwg.mxu0
        %v1203 = vsel %vm770, %v1200, -inf
        %1204 = vmax.xlane.f32.xlu0 %v1203
        %v1205 = vpop.xlane.xlu0 %1204
        %v1206 = vsub.f32 %v1200, %v1205
        %v1207 = vmul.f32 %v1206, 1.442695
        %v1208 = vpow.pop %v1207
        %v1209 = vsel %vm770, %v1208, 0.0
        %1210 = vadd.xlane.f32.xlu0 %v1209
        %v1211 = vpop.xlane.xlu0 %1210
        %v1212 = vrcp.pop %v1211
        %v1213 = vmul.f32 %v1208, %v1212
        %v1215 = vsel %vm770, %v1213, 0
        %1217 = vmatprep.subr.mxu0 0.0
        %1218 = vmatpush1.msra.mxu0 %v1130
        %1219 = vmatprep.subr.mxu0 0.0
        %1220 = vmatpush1.msra.mxu0 0.0
        %1221 = vmatprep.subr.mxu0 0.0
        %1222 = vmatpush1.msra.mxu0 0.0
        %1223 = vmatprep.subr.mxu0 0.0
        %1224 = vmatpush1.msra.mxu0 0.0
        %1225 = vmatprep.subr.mxu0 0.0
        %1226 = vmatpush1.msra.mxu0 0.0
        %1227 = vmatprep.subr.mxu0 0.0
        %1228 = vmatpush1.msra.mxu0 0.0
        %1229 = vmatprep.subr.mxu0 0.0
        %1230 = vmatpush1.msra.mxu0 0.0
        %1231 = vmatprep.subr.mxu0 0.0
        %1232 = vmatpush1.msra.mxu0 0.0
        %1233 = vmatprep.subr.mxu0 0.0
        %1234 = vmatpush1.msra.mxu0 0.0
        %1235 = vmatprep.subr.mxu0 0.0
        %1236 = vmatpush1.msra.mxu0 0.0
        %1237 = vmatprep.subr.mxu0 0.0
        %1238 = vmatpush1.msra.mxu0 0.0
        %1239 = vmatprep.subr.mxu0 0.0
        %1240 = vmatpush1.msra.mxu0 0.0
        %1241 = vmatprep.subr.mxu0 0.0
        %1242 = vmatpush1.msra.mxu0 0.0
        %1243 = vmatprep.subr.mxu0 0.0
        %1244 = vmatpush1.msra.mxu0 0.0
        %1245 = vmatprep.subr.mxu0 0.0
        %1246 = vmatpush1.msra.mxu0 0.0
        %1247 = vmatprep.subr.mxu0 0.0
        %1248 = vmatpush1.msra.mxu0 0.0
        %1249 = vmatprep.subr.mxu0 0.0
        %1250 = vmatpush1.msra.mxu0 0.0
        %1251 = vmatprep.subr.mxu0 0.0
        %1252 = vmatpush1.msra.mxu0 0.0
        %1253 = vmatprep.subr.mxu0 0.0
        %1254 = vmatpush1.msra.mxu0 0.0
        %1255 = vmatprep.subr.mxu0 0.0
        %1256 = vmatpush1.msra.mxu0 0.0
        %1257 = vmatprep.subr.mxu0 0.0
        %1258 = vmatpush1.msra.mxu0 0.0
        %1259 = vmatprep.subr.mxu0 0.0
        %1260 = vmatpush1.msra.mxu0 0.0
        %1261 = vmatprep.subr.mxu0 0.0
        %1262 = vmatpush1.msra.mxu0 0.0
        %1263 = vmatprep.subr.mxu0 0.0
        %1264 = vmatpush1.msra.mxu0 0.0
        %1265 = vmatprep.subr.mxu0 0.0
        %1266 = vmatpush1.msra.mxu0 0.0
        %1267 = vmatprep.subr.mxu0 0.0
        %1268 = vmatpush1.msra.mxu0 0.0
        %1269 = vmatprep.subr.mxu0 0.0
        %1270 = vmatpush1.msra.mxu0 0.0
        %1271 = vmatprep.subr.mxu0 0.0
        %1272 = vmatpush1.msra.mxu0 0.0
        %1273 = vmatprep.subr.mxu0 0.0
        %1274 = vmatpush1.msra.mxu0 0.0
        %1275 = vmatprep.subr.mxu0 0.0
        %1276 = vmatpush1.msra.mxu0 0.0
        %1277 = vmatprep.subr.mxu0 0.0
        %1278 = vmatpush1.msra.mxu0 0.0
        %1279 = vmatprep.subr.mxu0 0.0
        %1280 = vmatpush1.msra.mxu0 0.0
        %1281 = vmatprep.mubr.f32.mxu0 0.0
        %1282 = vmatmul.mubr.f32.gmra.mrb[0].mxu0 %v1215
        %v1283 = vpop.f32.mrb[0].mxu0
        %v1284 = vadd.f32 0.0, %v1283
        %v1285 = vpop.f32.mrb[0].mxu0
        %1286 = vdwg.mxu0
        %1287 = vmatprep.subr.mxu0 0.0
        %1288 = vmatpush1.msra.mxu0 %v907
        %1289 = vmatprep.subr.mxu0 0.0
        %1290 = vmatpush1.msra.mxu0 %v908
        %1291 = vmatprep.subr.mxu0 0.0
        %1292 = vmatpush1.msra.mxu0 %v909
        %1293 = vmatprep.subr.mxu0 0.0
        %1294 = vmatpush1.msra.mxu0 %v910
        %1295 = vmatprep.subr.mxu0 0.0
        %1296 = vmatpush1.msra.mxu0 %v911
        %1297 = vmatprep.subr.mxu0 0.0
        %1298 = vmatpush1.msra.mxu0 %v912
        %1299 = vmatprep.subr.mxu0 0.0
        %1300 = vmatpush1.msra.mxu0 %v913
        %1301 = vmatprep.subr.mxu0 0.0
        %1302 = vmatpush1.msra.mxu0 %v914
        %1303 = vmatprep.subr.mxu0 0.0
        %1304 = vmatpush1.msra.mxu0 %v915
        %1305 = vmatprep.subr.mxu0 0.0
        %1306 = vmatpush1.msra.mxu0 %v916
        %1307 = vmatprep.subr.mxu0 0.0
        %1308 = vmatpush1.msra.mxu0 %v917
        %1309 = vmatprep.subr.mxu0 0.0
        %1310 = vmatpush1.msra.mxu0 %v918
        %1311 = vmatprep.subr.mxu0 0.0
        %1312 = vmatpush1.msra.mxu0 %v919
        %1313 = vmatprep.subr.mxu0 0.0
        %1314 = vmatpush1.msra.mxu0 %v920
        %1315 = vmatprep.subr.mxu0 0.0
        %1316 = vmatpush1.msra.mxu0 %v921
        %1317 = vmatprep.subr.mxu0 0.0
        %1318 = vmatpush1.msra.mxu0 %v922
        %1319 = vmatprep.subr.mxu0 0.0
        %1320 = vmatpush1.msra.mxu0 0.0
        %1321 = vmatprep.subr.mxu0 0.0
        %1322 = vmatpush1.msra.mxu0 0.0
        %1323 = vmatprep.subr.mxu0 0.0
        %1324 = vmatpush1.msra.mxu0 0.0
        %1325 = vmatprep.subr.mxu0 0.0
        %1326 = vmatpush1.msra.mxu0 0.0
        %1327 = vmatprep.subr.mxu0 0.0
        %1328 = vmatpush1.msra.mxu0 0.0
        %1329 = vmatprep.subr.mxu0 0.0
        %1330 = vmatpush1.msra.mxu0 0.0
        %1331 = vmatprep.subr.mxu0 0.0
        %1332 = vmatpush1.msra.mxu0 0.0
        %1333 = vmatprep.subr.mxu0 0.0
        %1334 = vmatpush1.msra.mxu0 0.0
        %1335 = vmatprep.subr.mxu0 0.0
        %1336 = vmatpush1.msra.mxu0 0.0
        %1337 = vmatprep.subr.mxu0 0.0
        %1338 = vmatpush1.msra.mxu0 0.0
        %1339 = vmatprep.subr.mxu0 0.0
        %1340 = vmatpush1.msra.mxu0 0.0
        %1341 = vmatprep.subr.mxu0 0.0
        %1342 = vmatpush1.msra.mxu0 0.0
        %1343 = vmatprep.subr.mxu0 0.0
        %1344 = vmatpush1.msra.mxu0 0.0
        %1345 = vmatprep.subr.mxu0 0.0
        %1346 = vmatpush1.msra.mxu0 0.0
        %1347 = vmatprep.subr.mxu0 0.0
        %1348 = vmatpush1.msra.mxu0 0.0
        %1349 = vmatprep.subr.mxu0 0.0
        %1350 = vmatpush1.msra.mxu0 0.0
        %1351 = vmatprep.mubr.f32.mxu0 0.0
        %1352 = vmatmul.mubr.f32.gmra.mrb[0].mxu0 %v1284
        %v1353 = vpop.f32.mrb[0].mxu0
        %v1354 = vadd.f32 0.0, %v1353
        %v1355 = vpop.f32.mrb[0].mxu0
        %1356 = vdwg.mxu0
        %1357 = vmatprep.subr.mxu0 0.0
        %1358 = vmatpush1.msra.mxu0 %v474
        %1359 = vmatprep.subr.mxu0 0.0
        %1360 = vmatpush1.msra.mxu0 %v475
        %1361 = vmatprep.subr.mxu0 0.0
        %1362 = vmatpush1.msra.mxu0 %v476
        %1363 = vmatprep.subr.mxu0 0.0
        %1364 = vmatpush1.msra.mxu0 %v477
        %1365 = vmatprep.subr.mxu0 0.0
        %1366 = vmatpush1.msra.mxu0 %v478
        %1367 = vmatprep.subr.mxu0 0.0
        %1368 = vmatpush1.msra.mxu0 %v479
        %1369 = vmatprep.subr.mxu0 0.0
        %1370 = vmatpush1.msra.mxu0 %v480
        %1371 = vmatprep.subr.mxu0 0.0
        %1372 = vmatpush1.msra.mxu0 %v481
        %1373 = vmatprep.subr.mxu0 0.0
        %1374 = vmatpush1.msra.mxu0 %v482
        %1375 = vmatprep.subr.mxu0 0.0
        %1376 = vmatpush1.msra.mxu0 %v483
        %1377 = vmatprep.subr.mxu0 0.0
        %1378 = vmatpush1.msra.mxu0 %v484
        %1379 = vmatprep.subr.mxu0 0.0
        %1380 = vmatpush1.msra.mxu0 %v485
        %1381 = vmatprep.subr.mxu0 0.0
        %1382 = vmatpush1.msra.mxu0 %v486
        %1383 = vmatprep.subr.mxu0 0.0
        %1384 = vmatpush1.msra.mxu0 %v487
        %1385 = vmatprep.subr.mxu0 0.0
        %1386 = vmatpush1.msra.mxu0 %v488
        %1387 = vmatprep.subr.mxu0 0.0
        %1388 = vmatpush1.msra.mxu0 %v489
        %1389 = vmatprep.subr.mxu0 0.0
        %1390 = vmatpush1.msra.mxu0 0.0
        %1391 = vmatprep.subr.mxu0 0.0
        %1392 = vmatpush1.msra.mxu0 0.0
        %1393 = vmatprep.subr.mxu0 0.0
        %1394 = vmatpush1.msra.mxu0 0.0
        %1395 = vmatprep.subr.mxu0 0.0
        %1396 = vmatpush1.msra.mxu0 0.0
        %1397 = vmatprep.subr.mxu0 0.0
        %1398 = vmatpush1.msra.mxu0 0.0
        %1399 = vmatprep.subr.mxu0 0.0
        %1400 = vmatpush1.msra.mxu0 0.0
        %1401 = vmatprep.subr.mxu0 0.0
        %1402 = vmatpush1.msra.mxu0 0.0
        %1403 = vmatprep.subr.mxu0 0.0
        %1404 = vmatpush1.msra.mxu0 0.0
        %1405 = vmatprep.subr.mxu0 0.0
        %1406 = vmatpush1.msra.mxu0 0.0
        %1407 = vmatprep.subr.mxu0 0.0
        %1408 = vmatpush1.msra.mxu0 0.0
        %1409 = vmatprep.subr.mxu0 0.0
        %1410 = vmatpush1.msra.mxu0 0.0
        %1411 = vmatprep.subr.mxu0 0.0
        %1412 = vmatpush1.msra.mxu0 0.0
        %1413 = vmatprep.subr.mxu0 0.0
        %1414 = vmatpush1.msra.mxu0 0.0
        %1415 = vmatprep.subr.mxu0 0.0
        %1416 = vmatpush1.msra.mxu0 0.0
        %1417 = vmatprep.subr.mxu0 0.0
        %1418 = vmatpush1.msra.mxu0 0.0
        %1419 = vmatprep.subr.mxu0 0.0
        %1420 = vmatpush1.msra.mxu0 0.0
        %1421 = vmatprep.mubr.f32.mxu0 0.0
        %1422 = vmatmul.mubr.f32.gmra.mrb[0].mxu0 %v852
        %v1423 = vpop.f32.mrb[0].mxu0
        %v1424 = vadd.f32 %v1354, %v1423
        %v1425 = vpop.f32.mrb[0].mxu0
        %1426 = vdwg.mxu0
        %s1427 = scalar_lea.vmem [#allocation8], 256
        %v1428 = vld [vmem:[%s1427] sm:$0xff]
        %v1429 = vld [vmem:[%s1427 + $0x8] sm:$0xff]
        %v1430 = vld [vmem:[%s1427 + $0x10] sm:$0xff]
        %v1431 = vld [vmem:[%s1427 + $0x18] sm:$0xff]
        %v1432 = vld [vmem:[%s1427 + $0x20] sm:$0xff]
        %v1433 = vld [vmem:[%s1427 + $0x28] sm:$0xff]
        %v1434 = vld [vmem:[%s1427 + $0x30] sm:$0xff]
        %v1435 = vld [vmem:[%s1427 + $0x38] sm:$0xff]
        %v1436 = vld [vmem:[%s1427 + $0x40] sm:$0xff]
        %v1437 = vld [vmem:[%s1427 + $0x48] sm:$0xff]
        %v1438 = vld [vmem:[%s1427 + $0x50] sm:$0xff]
        %v1439 = vld [vmem:[%s1427 + $0x58] sm:$0xff]
        %v1440 = vld [vmem:[%s1427 + $0x60] sm:$0xff]
        %v1441 = vld [vmem:[%s1427 + $0x68] sm:$0xff]
        %v1442 = vld [vmem:[%s1427 + $0x70] sm:$0xff]
        %v1443 = vld [vmem:[%s1427 + $0x78] sm:$0xff]
        %s1444 = scalar_lea.vmem [#allocation10], 256
        %v1445 = vld [vmem:[%s1444] sm:$0xff]
        %v1446 = vld [vmem:[%s1444 + $0x8] sm:$0xff]
        %v1447 = vld [vmem:[%s1444 + $0x10] sm:$0xff]
        %v1448 = vld [vmem:[%s1444 + $0x18] sm:$0xff]
        %v1449 = vld [vmem:[%s1444 + $0x20] sm:$0xff]
        %v1450 = vld [vmem:[%s1444 + $0x28] sm:$0xff]
        %v1451 = vld [vmem:[%s1444 + $0x30] sm:$0xff]
        %v1452 = vld [vmem:[%s1444 + $0x38] sm:$0xff]
        %v1453 = vld [vmem:[%s1444 + $0x40] sm:$0xff]
        %v1454 = vld [vmem:[%s1444 + $0x48] sm:$0xff]
        %v1455 = vld [vmem:[%s1444 + $0x50] sm:$0xff]
        %v1456 = vld [vmem:[%s1444 + $0x58] sm:$0xff]
        %v1457 = vld [vmem:[%s1444 + $0x60] sm:$0xff]
        %v1458 = vld [vmem:[%s1444 + $0x68] sm:$0xff]
        %v1459 = vld [vmem:[%s1444 + $0x70] sm:$0xff]
        %v1460 = vld [vmem:[%s1444 + $0x78] sm:$0xff]
        %s1461 = scalar_lea.vmem [#allocation11], 256
        %v1462 = vld [vmem:[%s1461] sm:$0xff]
        %v1463 = vld [vmem:[%s1461 + $0x8] sm:$0xff]
        %v1464 = vld [vmem:[%s1461 + $0x10] sm:$0xff]
        %v1465 = vld [vmem:[%s1461 + $0x18] sm:$0xff]
        %v1466 = vld [vmem:[%s1461 + $0x20] sm:$0xff]
        %v1467 = vld [vmem:[%s1461 + $0x28] sm:$0xff]
        %v1468 = vld [vmem:[%s1461 + $0x30] sm:$0xff]
        %v1469 = vld [vmem:[%s1461 + $0x38] sm:$0xff]
        %v1470 = vld [vmem:[%s1461 + $0x40] sm:$0xff]
        %v1471 = vld [vmem:[%s1461 + $0x48] sm:$0xff]
        %v1472 = vld [vmem:[%s1461 + $0x50] sm:$0xff]
        %v1473 = vld [vmem:[%s1461 + $0x58] sm:$0xff]
        %v1474 = vld [vmem:[%s1461 + $0x60] sm:$0xff]
        %v1475 = vld [vmem:[%s1461 + $0x68] sm:$0xff]
        %v1476 = vld [vmem:[%s1461 + $0x70] sm:$0xff]
        %v1477 = vld [vmem:[%s1461 + $0x78] sm:$0xff]
        %s1478 = scalar_lea.vmem [#allocation13], 256
        %v1479 = vld [vmem:[%s1478] sm:$0xff]
        %v1480 = vld [vmem:[%s1478 + $0x8] sm:$0xff]
        %v1481 = vld [vmem:[%s1478 + $0x10] sm:$0xff]
        %v1482 = vld [vmem:[%s1478 + $0x18] sm:$0xff]
        %v1483 = vld [vmem:[%s1478 + $0x20] sm:$0xff]
        %v1484 = vld [vmem:[%s1478 + $0x28] sm:$0xff]
        %v1485 = vld [vmem:[%s1478 + $0x30] sm:$0xff]
        %v1486 = vld [vmem:[%s1478 + $0x38] sm:$0xff]
        %v1487 = vld [vmem:[%s1478 + $0x40] sm:$0xff]
        %v1488 = vld [vmem:[%s1478 + $0x48] sm:$0xff]
        %v1489 = vld [vmem:[%s1478 + $0x50] sm:$0xff]
        %v1490 = vld [vmem:[%s1478 + $0x58] sm:$0xff]
        %v1491 = vld [vmem:[%s1478 + $0x60] sm:$0xff]
        %v1492 = vld [vmem:[%s1478 + $0x68] sm:$0xff]
        %v1493 = vld [vmem:[%s1478 + $0x70] sm:$0xff]
        %v1494 = vld [vmem:[%s1478 + $0x78] sm:$0xff]
        %1495 = vmatprep.subr.mxu0 0.0
        %1496 = vmatpush1.msra.mxu0 %v1428
        %1497 = vmatprep.subr.mxu0 0.0
        %1498 = vmatpush1.msra.mxu0 %v1429
        %1499 = vmatprep.subr.mxu0 0.0
        %1500 = vmatpush1.msra.mxu0 %v1430
        %1501 = vmatprep.subr.mxu0 0.0
        %1502 = vmatpush1.msra.mxu0 %v1431
        %1503 = vmatprep.subr.mxu0 0.0
        %1504 = vmatpush1.msra.mxu0 %v1432
        %1505 = vmatprep.subr.mxu0 0.0
        %1506 = vmatpush1.msra.mxu0 %v1433
        %1507 = vmatprep.subr.mxu0 0.0
        %1508 = vmatpush1.msra.mxu0 %v1434
        %1509 = vmatprep.subr.mxu0 0.0
        %1510 = vmatpush1.msra.mxu0 %v1435
        %1511 = vmatprep.subr.mxu0 0.0
        %1512 = vmatpush1.msra.mxu0 %v1436
        %1513 = vmatprep.subr.mxu0 0.0
        %1514 = vmatpush1.msra.mxu0 %v1437
        %1515 = vmatprep.subr.mxu0 0.0
        %1516 = vmatpush1.msra.mxu0 %v1438
        %1517 = vmatprep.subr.mxu0 0.0
        %1518 = vmatpush1.msra.mxu0 %v1439
        %1519 = vmatprep.subr.mxu0 0.0
        %1520 = vmatpush1.msra.mxu0 %v1440
        %1521 = vmatprep.subr.mxu0 0.0
        %1522 = vmatpush1.msra.mxu0 %v1441
        %1523 = vmatprep.subr.mxu0 0.0
        %1524 = vmatpush1.msra.mxu0 %v1442
        %1525 = vmatprep.subr.mxu0 0.0
        %1526 = vmatpush1.msra.mxu0 %v1443
        %1527 = vmatprep.subr.mxu0 0.0
        %1528 = vmatpush1.msra.mxu0 0.0
        %1529 = vmatprep.subr.mxu0 0.0
        %1530 = vmatpush1.msra.mxu0 0.0
        %1531 = vmatprep.subr.mxu0 0.0
        %1532 = vmatpush1.msra.mxu0 0.0
        %1533 = vmatprep.subr.mxu0 0.0
        %1534 = vmatpush1.msra.mxu0 0.0
        %1535 = vmatprep.subr.mxu0 0.0
        %1536 = vmatpush1.msra.mxu0 0.0
        %1537 = vmatprep.subr.mxu0 0.0
        %1538 = vmatpush1.msra.mxu0 0.0
        %1539 = vmatprep.subr.mxu0 0.0
        %1540 = vmatpush1.msra.mxu0 0.0
        %1541 = vmatprep.subr.mxu0 0.0
        %1542 = vmatpush1.msra.mxu0 0.0
        %1543 = vmatprep.subr.mxu0 0.0
        %1544 = vmatpush1.msra.mxu0 0.0
        %1545 = vmatprep.subr.mxu0 0.0
        %1546 = vmatpush1.msra.mxu0 0.0
        %1547 = vmatprep.subr.mxu0 0.0
        %1548 = vmatpush1.msra.mxu0 0.0
        %1549 = vmatprep.subr.mxu0 0.0
        %1550 = vmatpush1.msra.mxu0 0.0
        %1551 = vmatprep.subr.mxu0 0.0
        %1552 = vmatpush1.msra.mxu0 0.0
        %1553 = vmatprep.subr.mxu0 0.0
        %1554 = vmatpush1.msra.mxu0 0.0
        %1555 = vmatprep.subr.mxu0 0.0
        %1556 = vmatpush1.msra.mxu0 0.0
        %1557 = vmatprep.subr.mxu0 0.0
        %1558 = vmatpush1.msra.mxu0 0.0
        %1559 = vmatprep.mubr.f32.mxu0 0.0
        %1560 = vmatmul.mubr.f32.gmra.mrb[0].mxu0 %v423
        %v1561 = vpop.f32.mrb[0].mxu0
        %v1562 = vadd.f32 0.0, %v1561
        %v1563 = vpop.f32.mrb[0].mxu0
        %1564 = vdwg.mxu0
        %1565 = vmatprep.subr.mxu0 0.0
        %1566 = vmatpush1.msra.mxu0 %v1445
        %1567 = vmatprep.subr.mxu0 0.0
        %1568 = vmatpush1.msra.mxu0 %v1446
        %1569 = vmatprep.subr.mxu0 0.0
        %1570 = vmatpush1.msra.mxu0 %v1447
        %1571 = vmatprep.subr.mxu0 0.0
        %1572 = vmatpush1.msra.mxu0 %v1448
        %1573 = vmatprep.subr.mxu0 0.0
        %1574 = vmatpush1.msra.mxu0 %v1449
        %1575 = vmatprep.subr.mxu0 0.0
        %1576 = vmatpush1.msra.mxu0 %v1450
        %1577 = vmatprep.subr.mxu0 0.0
        %1578 = vmatpush1.msra.mxu0 %v1451
        %1579 = vmatprep.subr.mxu0 0.0
        %1580 = vmatpush1.msra.mxu0 %v1452
        %1581 = vmatprep.subr.mxu0 0.0
        %1582 = vmatpush1.msra.mxu0 %v1453
        %1583 = vmatprep.subr.mxu0 0.0
        %1584 = vmatpush1.msra.mxu0 %v1454
        %1585 = vmatprep.subr.mxu0 0.0
        %1586 = vmatpush1.msra.mxu0 %v1455
        %1587 = vmatprep.subr.mxu0 0.0
        %1588 = vmatpush1.msra.mxu0 %v1456
        %1589 = vmatprep.subr.mxu0 0.0
        %1590 = vmatpush1.msra.mxu0 %v1457
        %1591 = vmatprep.subr.mxu0 0.0
        %1592 = vmatpush1.msra.mxu0 %v1458
        %1593 = vmatprep.subr.mxu0 0.0
        %1594 = vmatpush1.msra.mxu0 %v1459
        %1595 = vmatprep.subr.mxu0 0.0
        %1596 = vmatpush1.msra.mxu0 %v1460
        %1597 = vmatprep.subr.mxu0 0.0
        %1598 = vmatpush1.msra.mxu0 0.0
        %1599 = vmatprep.subr.mxu0 0.0
        %1600 = vmatpush1.msra.mxu0 0.0
        %1601 = vmatprep.subr.mxu0 0.0
        %1602 = vmatpush1.msra.mxu0 0.0
        %1603 = vmatprep.subr.mxu0 0.0
        %1604 = vmatpush1.msra.mxu0 0.0
        %1605 = vmatprep.subr.mxu0 0.0
        %1606 = vmatpush1.msra.mxu0 0.0
        %1607 = vmatprep.subr.mxu0 0.0
        %1608 = vmatpush1.msra.mxu0 0.0
        %1609 = vmatprep.subr.mxu0 0.0
        %1610 = vmatpush1.msra.mxu0 0.0
        %1611 = vmatprep.subr.mxu0 0.0
        %1612 = vmatpush1.msra.mxu0 0.0
        %1613 = vmatprep.subr.mxu0 0.0
        %1614 = vmatpush1.msra.mxu0 0.0
        %1615 = vmatprep.subr.mxu0 0.0
        %1616 = vmatpush1.msra.mxu0 0.0
        %1617 = vmatprep.subr.mxu0 0.0
        %1618 = vmatpush1.msra.mxu0 0.0
        %1619 = vmatprep.subr.mxu0 0.0
        %1620 = vmatpush1.msra.mxu0 0.0
        %1621 = vmatprep.subr.mxu0 0.0
        %1622 = vmatpush1.msra.mxu0 0.0
        %1623 = vmatprep.subr.mxu0 0.0
        %1624 = vmatpush1.msra.mxu0 0.0
        %1625 = vmatprep.subr.mxu0 0.0
        %1626 = vmatpush1.msra.mxu0 0.0
        %1627 = vmatprep.subr.mxu0 0.0
        %1628 = vmatpush1.msra.mxu0 0.0
        %1629 = vmatprep.mubr.f32.mxu0 0.0
        %1630 = vmatmul.mubr.f32.gmra.mrb[0].mxu0 %v424
        %v1631 = vpop.f32.mrb[0].mxu0
        %v1632 = vadd.f32 0.0, %v1631
        %v1633 = vpop.f32.mrb[0].mxu0
        %1634 = vdwg.mxu0
        %1635 = vmatprep.subr.mxu0 0.0
        %1636 = vmatpush1.msra.mxu0 %v1462
        %1637 = vmatprep.subr.mxu0 0.0
        %1638 = vmatpush1.msra.mxu0 %v1463
        %1639 = vmatprep.subr.mxu0 0.0
        %1640 = vmatpush1.msra.mxu0 %v1464
        %1641 = vmatprep.subr.mxu0 0.0
        %1642 = vmatpush1.msra.mxu0 %v1465
        %1643 = vmatprep.subr.mxu0 0.0
        %1644 = vmatpush1.msra.mxu0 %v1466
        %1645 = vmatprep.subr.mxu0 0.0
        %1646 = vmatpush1.msra.mxu0 %v1467
        %1647 = vmatprep.subr.mxu0 0.0
        %1648 = vmatpush1.msra.mxu0 %v1468
        %1649 = vmatprep.subr.mxu0 0.0
        %1650 = vmatpush1.msra.mxu0 %v1469
        %1651 = vmatprep.subr.mxu0 0.0
        %1652 = vmatpush1.msra.mxu0 %v1470
        %1653 = vmatprep.subr.mxu0 0.0
        %1654 = vmatpush1.msra.mxu0 %v1471
        %1655 = vmatprep.subr.mxu0 0.0
        %1656 = vmatpush1.msra.mxu0 %v1472
        %1657 = vmatprep.subr.mxu0 0.0
        %1658 = vmatpush1.msra.mxu0 %v1473
        %1659 = vmatprep.subr.mxu0 0.0
        %1660 = vmatpush1.msra.mxu0 %v1474
        %1661 = vmatprep.subr.mxu0 0.0
        %1662 = vmatpush1.msra.mxu0 %v1475
        %1663 = vmatprep.subr.mxu0 0.0
        %1664 = vmatpush1.msra.mxu0 %v1476
        %1665 = vmatprep.subr.mxu0 0.0
        %1666 = vmatpush1.msra.mxu0 %v1477
        %1667 = vmatprep.subr.mxu0 0.0
        %1668 = vmatpush1.msra.mxu0 0.0
        %1669 = vmatprep.subr.mxu0 0.0
        %1670 = vmatpush1.msra.mxu0 0.0
        %1671 = vmatprep.subr.mxu0 0.0
        %1672 = vmatpush1.msra.mxu0 0.0
        %1673 = vmatprep.subr.mxu0 0.0
        %1674 = vmatpush1.msra.mxu0 0.0
        %1675 = vmatprep.subr.mxu0 0.0
        %1676 = vmatpush1.msra.mxu0 0.0
        %1677 = vmatprep.subr.mxu0 0.0
        %1678 = vmatpush1.msra.mxu0 0.0
        %1679 = vmatprep.subr.mxu0 0.0
        %1680 = vmatpush1.msra.mxu0 0.0
        %1681 = vmatprep.subr.mxu0 0.0
        %1682 = vmatpush1.msra.mxu0 0.0
        %1683 = vmatprep.subr.mxu0 0.0
        %1684 = vmatpush1.msra.mxu0 0.0
        %1685 = vmatprep.subr.mxu0 0.0
        %1686 = vmatpush1.msra.mxu0 0.0
        %1687 = vmatprep.subr.mxu0 0.0
        %1688 = vmatpush1.msra.mxu0 0.0
        %1689 = vmatprep.subr.mxu0 0.0
        %1690 = vmatpush1.msra.mxu0 0.0
        %1691 = vmatprep.subr.mxu0 0.0
        %1692 = vmatpush1.msra.mxu0 0.0
        %1693 = vmatprep.subr.mxu0 0.0
        %1694 = vmatpush1.msra.mxu0 0.0
        %1695 = vmatprep.subr.mxu0 0.0
        %1696 = vmatpush1.msra.mxu0 0.0
        %1697 = vmatprep.subr.mxu0 0.0
        %1698 = vmatpush1.msra.mxu0 0.0
        %1699 = vmatprep.mubr.f32.mxu0 0.0
        %1700 = vmatmul.mubr.f32.gmra.mrb[0].mxu0 %v425
        %v1701 = vpop.f32.mrb[0].mxu0
        %v1702 = vadd.f32 0.0, %v1701
        %v1703 = vpop.f32.mrb[0].mxu0
        %1704 = vdwg.mxu0
        %1705 = vmatprep.subr.mxu0 0.0
        %1706 = vmatpush1.xpose.msra.mxu0 %v1632
        %1707 = vmatprep.subr.mxu0 0.0
        %1708 = vmatpush1.xpose.msra.mxu0 0.0
        %1709 = vmatprep.subr.mxu0 0.0
        %1710 = vmatpush1.xpose.msra.mxu0 0.0
        %1711 = vmatprep.subr.mxu0 0.0
        %1712 = vmatpush1.xpose.msra.mxu0 0.0
        %1713 = vmatprep.subr.mxu0 0.0
        %1714 = vmatpush1.xpose.msra.mxu0 0.0
        %1715 = vmatprep.subr.mxu0 0.0
        %1716 = vmatpush1.xpose.msra.mxu0 0.0
        %1717 = vmatprep.subr.mxu0 0.0
        %1718 = vmatpush1.xpose.msra.mxu0 0.0
        %1719 = vmatprep.subr.mxu0 0.0
        %1720 = vmatpush1.xpose.msra.mxu0 0.0
        %1721 = vmatprep.subr.mxu0 0.0
        %1722 = vmatpush1.xpose.msra.mxu0 0.0
        %1723 = vmatprep.subr.mxu0 0.0
        %1724 = vmatpush1.xpose.msra.mxu0 0.0
        %1725 = vmatprep.subr.mxu0 0.0
        %1726 = vmatpush1.xpose.msra.mxu0 0.0
        %1727 = vmatprep.subr.mxu0 0.0
        %1728 = vmatpush1.xpose.msra.mxu0 0.0
        %1729 = vmatprep.subr.mxu0 0.0
        %1730 = vmatpush1.xpose.msra.mxu0 0.0
        %1731 = vmatprep.subr.mxu0 0.0
        %1732 = vmatpush1.xpose.msra.mxu0 0.0
        %1733 = vmatprep.subr.mxu0 0.0
        %1734 = vmatpush1.xpose.msra.mxu0 0.0
        %1735 = vmatprep.subr.mxu0 0.0
        %1736 = vmatpush1.xpose.msra.mxu0 0.0
        %1737 = vmatprep.subr.mxu0 0.0
        %1738 = vmatpush1.xpose.msra.mxu0 0.0
        %1739 = vmatprep.subr.mxu0 0.0
        %1740 = vmatpush1.xpose.msra.mxu0 0.0
        %1741 = vmatprep.subr.mxu0 0.0
        %1742 = vmatpush1.xpose.msra.mxu0 0.0
        %1743 = vmatprep.subr.mxu0 0.0
        %1744 = vmatpush1.xpose.msra.mxu0 0.0
        %1745 = vmatprep.subr.mxu0 0.0
        %1746 = vmatpush1.xpose.msra.mxu0 0.0
        %1747 = vmatprep.subr.mxu0 0.0
        %1748 = vmatpush1.xpose.msra.mxu0 0.0
        %1749 = vmatprep.subr.mxu0 0.0
        %1750 = vmatpush1.xpose.msra.mxu0 0.0
        %1751 = vmatprep.subr.mxu0 0.0
        %1752 = vmatpush1.xpose.msra.mxu0 0.0
        %1753 = vmatprep.subr.mxu0 0.0
        %1754 = vmatpush1.xpose.msra.mxu0 0.0
        %1755 = vmatprep.subr.mxu0 0.0
        %1756 = vmatpush1.xpose.msra.mxu0 0.0
        %1757 = vmatprep.subr.mxu0 0.0
        %1758 = vmatpush1.xpose.msra.mxu0 0.0
        %1759 = vmatprep.subr.mxu0 0.0
        %1760 = vmatpush1.xpose.msra.mxu0 0.0
        %1761 = vmatprep.subr.mxu0 0.0
        %1762 = vmatpush1.xpose.msra.mxu0 0.0
        %1763 = vmatprep.subr.mxu0 0.0
        %1764 = vmatpush1.xpose.msra.mxu0 0.0
        %1765 = vmatprep.subr.mxu0 0.0
        %1766 = vmatpush1.xpose.msra.mxu0 0.0
        %1767 = vmatprep.subr.mxu0 0.0
        %1768 = vmatpush1.xpose.msra.mxu0 0.0
        %1769 = vmatprep.mubr.f32.mxu0 0.0
        %1770 = vmatmul.mubr.f32.gmra.mrb[0].mxu0 %v1562
        %v1771 = vpop.f32.mrb[0].mxu0
        %v1772 = vadd.f32 0.0, %v1771
        %v1773 = vpop.f32.mrb[0].mxu0
        %1774 = vdwg.mxu0
        %v1775 = vsel %vm770, %v1772, -inf
        %1776 = vmax.xlane.f32.xlu0 %v1775
        %v1777 = vpop.xlane.xlu0 %1776
        %v1778 = vsub.f32 %v1772, %v1777
        %v1779 = vmul.f32 %v1778, 1.442695
        %v1780 = vpow.pop %v1779
        %v1781 = vsel %vm770, %v1780, 0.0
        %1782 = vadd.xlane.f32.xlu0 %v1781
        %v1783 = vpop.xlane.xlu0 %1782
        %v1784 = vrcp.pop %v1783
        %v1785 = vmul.f32 %v1780, %v1784
        %v1787 = vsel %vm770, %v1785, 0
        %1789 = vmatprep.subr.mxu0 0.0
        %1790 = vmatpush1.msra.mxu0 %v1702
        %1791 = vmatprep.subr.mxu0 0.0
        %1792 = vmatpush1.msra.mxu0 0.0
        %1793 = vmatprep.subr.mxu0 0.0
        %1794 = vmatpush1.msra.mxu0 0.0
        %1795 = vmatprep.subr.mxu0 0.0
        %1796 = vmatpush1.msra.mxu0 0.0
        %1797 = vmatprep.subr.mxu0 0.0
        %1798 = vmatpush1.msra.mxu0 0.0
        %1799 = vmatprep.subr.mxu0 0.0
        %1800 = vmatpush1.msra.mxu0 0.0
        %1801 = vmatprep.subr.mxu0 0.0
        %1802 = vmatpush1.msra.mxu0 0.0
        %1803 = vmatprep.subr.mxu0 0.0
        %1804 = vmatpush1.msra.mxu0 0.0
        %1805 = vmatprep.subr.mxu0 0.0
        %1806 = vmatpush1.msra.mxu0 0.0
        %1807 = vmatprep.subr.mxu0 0.0
        %1808 = vmatpush1.msra.mxu0 0.0
        %1809 = vmatprep.subr.mxu0 0.0
        %1810 = vmatpush1.msra.mxu0 0.0
        %1811 = vmatprep.subr.mxu0 0.0
        %1812 = vmatpush1.msra.mxu0 0.0
        %1813 = vmatprep.subr.mxu0 0.0
        %1814 = vmatpush1.msra.mxu0 0.0
        %1815 = vmatprep.subr.mxu0 0.0
        %1816 = vmatpush1.msra.mxu0 0.0
        %1817 = vmatprep.subr.mxu0 0.0
        %1818 = vmatpush1.msra.mxu0 0.0
        %1819 = vmatprep.subr.mxu0 0.0
        %1820 = vmatpush1.msra.mxu0 0.0
        %1821 = vmatprep.subr.mxu0 0.0
        %1822 = vmatpush1.msra.mxu0 0.0
        %1823 = vmatprep.subr.mxu0 0.0
        %1824 = vmatpush1.msra.mxu0 0.0
        %1825 = vmatprep.subr.mxu0 0.0
        %1826 = vmatpush1.msra.mxu0 0.0
        %1827 = vmatprep.subr.mxu0 0.0
        %1828 = vmatpush1.msra.mxu0 0.0
        %1829 = vmatprep.subr.mxu0 0.0
        %1830 = vmatpush1.msra.mxu0 0.0
        %1831 = vmatprep.subr.mxu0 0.0
        %1832 = vmatpush1.msra.mxu0 0.0
        %1833 = vmatprep.subr.mxu0 0.0
        %1834 = vmatpush1.msra.mxu0 0.0
        %1835 = vmatprep.subr.mxu0 0.0
        %1836 = vmatpush1.msra.mxu0 0.0
        %1837 = vmatprep.subr.mxu0 0.0
        %1838 = vmatpush1.msra.mxu0 0.0
        %1839 = vmatprep.subr.mxu0 0.0
        %1840 = vmatpush1.msra.mxu0 0.0
        %1841 = vmatprep.subr.mxu0 0.0
        %1842 = vmatpush1.msra.mxu0 0.0
        %1843 = vmatprep.subr.mxu0 0.0
        %1844 = vmatpush1.msra.mxu0 0.0
        %1845 = vmatprep.subr.mxu0 0.0
        %1846 = vmatpush1.msra.mxu0 0.0
        %1847 = vmatprep.subr.mxu0 0.0
        %1848 = vmatpush1.msra.mxu0 0.0
        %1849 = vmatprep.subr.mxu0 0.0
        %1850 = vmatpush1.msra.mxu0 0.0
        %1851 = vmatprep.subr.mxu0 0.0
        %1852 = vmatpush1.msra.mxu0 0.0
        %1853 = vmatprep.mubr.f32.mxu0 0.0
        %1854 = vmatmul.mubr.f32.gmra.mrb[0].mxu0 %v1787
        %v1855 = vpop.f32.mrb[0].mxu0
        %v1856 = vadd.f32 0.0, %v1855
        %v1857 = vpop.f32.mrb[0].mxu0
        %1858 = vdwg.mxu0
        %1859 = vmatprep.subr.mxu0 0.0
        %1860 = vmatpush1.msra.mxu0 %v1479
        %1861 = vmatprep.subr.mxu0 0.0
        %1862 = vmatpush1.msra.mxu0 %v1480
        %1863 = vmatprep.subr.mxu0 0.0
        %1864 = vmatpush1.msra.mxu0 %v1481
        %1865 = vmatprep.subr.mxu0 0.0
        %1866 = vmatpush1.msra.mxu0 %v1482
        %1867 = vmatprep.subr.mxu0 0.0
        %1868 = vmatpush1.msra.mxu0 %v1483
        %1869 = vmatprep.subr.mxu0 0.0
        %1870 = vmatpush1.msra.mxu0 %v1484
        %1871 = vmatprep.subr.mxu0 0.0
        %1872 = vmatpush1.msra.mxu0 %v1485
        %1873 = vmatprep.subr.mxu0 0.0
        %1874 = vmatpush1.msra.mxu0 %v1486
        %1875 = vmatprep.subr.mxu0 0.0
        %1876 = vmatpush1.msra.mxu0 %v1487
        %1877 = vmatprep.subr.mxu0 0.0
        %1878 = vmatpush1.msra.mxu0 %v1488
        %1879 = vmatprep.subr.mxu0 0.0
        %1880 = vmatpush1.msra.mxu0 %v1489
        %1881 = vmatprep.subr.mxu0 0.0
        %1882 = vmatpush1.msra.mxu0 %v1490
        %1883 = vmatprep.subr.mxu0 0.0
        %1884 = vmatpush1.msra.mxu0 %v1491
        %1885 = vmatprep.subr.mxu0 0.0
        %1886 = vmatpush1.msra.mxu0 %v1492
        %1887 = vmatprep.subr.mxu0 0.0
        %1888 = vmatpush1.msra.mxu0 %v1493
        %1889 = vmatprep.subr.mxu0 0.0
        %1890 = vmatpush1.msra.mxu0 %v1494
        %1891 = vmatprep.subr.mxu0 0.0
        %1892 = vmatpush1.msra.mxu0 0.0
        %1893 = vmatprep.subr.mxu0 0.0
        %1894 = vmatpush1.msra.mxu0 0.0
        %1895 = vmatprep.subr.mxu0 0.0
        %1896 = vmatpush1.msra.mxu0 0.0
        %1897 = vmatprep.subr.mxu0 0.0
        %1898 = vmatpush1.msra.mxu0 0.0
        %1899 = vmatprep.subr.mxu0 0.0
        %1900 = vmatpush1.msra.mxu0 0.0
        %1901 = vmatprep.subr.mxu0 0.0
        %1902 = vmatpush1.msra.mxu0 0.0
        %1903 = vmatprep.subr.mxu0 0.0
        %1904 = vmatpush1.msra.mxu0 0.0
        %1905 = vmatprep.subr.mxu0 0.0
        %1906 = vmatpush1.msra.mxu0 0.0
        %1907 = vmatprep.subr.mxu0 0.0
        %1908 = vmatpush1.msra.mxu0 0.0
        %1909 = vmatprep.subr.mxu0 0.0
        %1910 = vmatpush1.msra.mxu0 0.0
        %1911 = vmatprep.subr.mxu0 0.0
        %1912 = vmatpush1.msra.mxu0 0.0
        %1913 = vmatprep.subr.mxu0 0.0
        %1914 = vmatpush1.msra.mxu0 0.0
        %1915 = vmatprep.subr.mxu0 0.0
        %1916 = vmatpush1.msra.mxu0 0.0
        %1917 = vmatprep.subr.mxu0 0.0
        %1918 = vmatpush1.msra.mxu0 0.0
        %1919 = vmatprep.subr.mxu0 0.0
        %1920 = vmatpush1.msra.mxu0 0.0
        %1921 = vmatprep.subr.mxu0 0.0
        %1922 = vmatpush1.msra.mxu0 0.0
        %1923 = vmatprep.mubr.f32.mxu0 0.0
        %1924 = vmatmul.mubr.f32.gmra.mrb[0].mxu0 %v1856
        %v1925 = vpop.f32.mrb[0].mxu0
        %v1926 = vadd.f32 0.0, %v1925
        %v1927 = vpop.f32.mrb[0].mxu0
        %1928 = vdwg.mxu0
        %v1929 = vadd.f32 %v1424, %v1926
        %s1930 = scalar_lea.vmem [#allocation8], 384
        %v1931 = vld [vmem:[%s1930] sm:$0xff]
        %v1932 = vld [vmem:[%s1930 + $0x8] sm:$0xff]
        %v1933 = vld [vmem:[%s1930 + $0x10] sm:$0xff]
        %v1934 = vld [vmem:[%s1930 + $0x18] sm:$0xff]
        %v1935 = vld [vmem:[%s1930 + $0x20] sm:$0xff]
        %v1936 = vld [vmem:[%s1930 + $0x28] sm:$0xff]
        %v1937 = vld [vmem:[%s1930 + $0x30] sm:$0xff]
        %v1938 = vld [vmem:[%s1930 + $0x38] sm:$0xff]
        %v1939 = vld [vmem:[%s1930 + $0x40] sm:$0xff]
        %v1940 = vld [vmem:[%s1930 + $0x48] sm:$0xff]
        %v1941 = vld [vmem:[%s1930 + $0x50] sm:$0xff]
        %v1942 = vld [vmem:[%s1930 + $0x58] sm:$0xff]
        %v1943 = vld [vmem:[%s1930 + $0x60] sm:$0xff]
        %v1944 = vld [vmem:[%s1930 + $0x68] sm:$0xff]
        %v1945 = vld [vmem:[%s1930 + $0x70] sm:$0xff]
        %v1946 = vld [vmem:[%s1930 + $0x78] sm:$0xff]
        %s1947 = scalar_lea.vmem [#allocation10], 384
        %v1948 = vld [vmem:[%s1947] sm:$0xff]
        %v1949 = vld [vmem:[%s1947 + $0x8] sm:$0xff]
        %v1950 = vld [vmem:[%s1947 + $0x10] sm:$0xff]
        %v1951 = vld [vmem:[%s1947 + $0x18] sm:$0xff]
        %v1952 = vld [vmem:[%s1947 + $0x20] sm:$0xff]
        %v1953 = vld [vmem:[%s1947 + $0x28] sm:$0xff]
        %v1954 = vld [vmem:[%s1947 + $0x30] sm:$0xff]
        %v1955 = vld [vmem:[%s1947 + $0x38] sm:$0xff]
        %v1956 = vld [vmem:[%s1947 + $0x40] sm:$0xff]
        %v1957 = vld [vmem:[%s1947 + $0x48] sm:$0xff]
        %v1958 = vld [vmem:[%s1947 + $0x50] sm:$0xff]
        %v1959 = vld [vmem:[%s1947 + $0x58] sm:$0xff]
        %v1960 = vld [vmem:[%s1947 + $0x60] sm:$0xff]
        %v1961 = vld [vmem:[%s1947 + $0x68] sm:$0xff]
        %v1962 = vld [vmem:[%s1947 + $0x70] sm:$0xff]
        %v1963 = vld [vmem:[%s1947 + $0x78] sm:$0xff]
        %s1964 = scalar_lea.vmem [#allocation11], 384
        %v1965 = vld [vmem:[%s1964] sm:$0xff]
        %v1966 = vld [vmem:[%s1964 + $0x8] sm:$0xff]
        %v1967 = vld [vmem:[%s1964 + $0x10] sm:$0xff]
        %v1968 = vld [vmem:[%s1964 + $0x18] sm:$0xff]
        %v1969 = vld [vmem:[%s1964 + $0x20] sm:$0xff]
        %v1970 = vld [vmem:[%s1964 + $0x28] sm:$0xff]
        %v1971 = vld [vmem:[%s1964 + $0x30] sm:$0xff]
        %v1972 = vld [vmem:[%s1964 + $0x38] sm:$0xff]
        %v1973 = vld [vmem:[%s1964 + $0x40] sm:$0xff]
        %v1974 = vld [vmem:[%s1964 + $0x48] sm:$0xff]
        %v1975 = vld [vmem:[%s1964 + $0x50] sm:$0xff]
        %v1976 = vld [vmem:[%s1964 + $0x58] sm:$0xff]
        %v1977 = vld [vmem:[%s1964 + $0x60] sm:$0xff]
        %v1978 = vld [vmem:[%s1964 + $0x68] sm:$0xff]
        %v1979 = vld [vmem:[%s1964 + $0x70] sm:$0xff]
        %v1980 = vld [vmem:[%s1964 + $0x78] sm:$0xff]
        %s1981 = scalar_lea.vmem [#allocation13], 384
        %v1982 = vld [vmem:[%s1981] sm:$0xff]
        %v1983 = vld [vmem:[%s1981 + $0x8] sm:$0xff]
        %v1984 = vld [vmem:[%s1981 + $0x10] sm:$0xff]
        %v1985 = vld [vmem:[%s1981 + $0x18] sm:$0xff]
        %v1986 = vld [vmem:[%s1981 + $0x20] sm:$0xff]
        %v1987 = vld [vmem:[%s1981 + $0x28] sm:$0xff]
        %v1988 = vld [vmem:[%s1981 + $0x30] sm:$0xff]
        %v1989 = vld [vmem:[%s1981 + $0x38] sm:$0xff]
        %v1990 = vld [vmem:[%s1981 + $0x40] sm:$0xff]
        %v1991 = vld [vmem:[%s1981 + $0x48] sm:$0xff]
        %v1992 = vld [vmem:[%s1981 + $0x50] sm:$0xff]
        %v1993 = vld [vmem:[%s1981 + $0x58] sm:$0xff]
        %v1994 = vld [vmem:[%s1981 + $0x60] sm:$0xff]
        %v1995 = vld [vmem:[%s1981 + $0x68] sm:$0xff]
        %v1996 = vld [vmem:[%s1981 + $0x70] sm:$0xff]
        %v1997 = vld [vmem:[%s1981 + $0x78] sm:$0xff]
        %1998 = vmatprep.subr.mxu0 0.0
        %1999 = vmatpush1.msra.mxu0 %v1931
        %2000 = vmatprep.subr.mxu0 0.0
        %2001 = vmatpush1.msra.mxu0 %v1932
        %2002 = vmatprep.subr.mxu0 0.0
        %2003 = vmatpush1.msra.mxu0 %v1933
        %2004 = vmatprep.subr.mxu0 0.0
        %2005 = vmatpush1.msra.mxu0 %v1934
        %2006 = vmatprep.subr.mxu0 0.0
        %2007 = vmatpush1.msra.mxu0 %v1935
        %2008 = vmatprep.subr.mxu0 0.0
        %2009 = vmatpush1.msra.mxu0 %v1936
        %2010 = vmatprep.subr.mxu0 0.0
        %2011 = vmatpush1.msra.mxu0 %v1937
        %2012 = vmatprep.subr.mxu0 0.0
        %2013 = vmatpush1.msra.mxu0 %v1938
        %2014 = vmatprep.subr.mxu0 0.0
        %2015 = vmatpush1.msra.mxu0 %v1939
        %2016 = vmatprep.subr.mxu0 0.0
        %2017 = vmatpush1.msra.mxu0 %v1940
        %2018 = vmatprep.subr.mxu0 0.0
        %2019 = vmatpush1.msra.mxu0 %v1941
        %2020 = vmatprep.subr.mxu0 0.0
        %2021 = vmatpush1.msra.mxu0 %v1942
        %2022 = vmatprep.subr.mxu0 0.0
        %2023 = vmatpush1.msra.mxu0 %v1943
        %2024 = vmatprep.subr.mxu0 0.0
        %2025 = vmatpush1.msra.mxu0 %v1944
        %2026 = vmatprep.subr.mxu0 0.0
        %2027 = vmatpush1.msra.mxu0 %v1945
        %2028 = vmatprep.subr.mxu0 0.0
        %2029 = vmatpush1.msra.mxu0 %v1946
        %2030 = vmatprep.subr.mxu0 0.0
        %2031 = vmatpush1.msra.mxu0 0.0
        %2032 = vmatprep.subr.mxu0 0.0
        %2033 = vmatpush1.msra.mxu0 0.0
        %2034 = vmatprep.subr.mxu0 0.0
        %2035 = vmatpush1.msra.mxu0 0.0
        %2036 = vmatprep.subr.mxu0 0.0
        %2037 = vmatpush1.msra.mxu0 0.0
        %2038 = vmatprep.subr.mxu0 0.0
        %2039 = vmatpush1.msra.mxu0 0.0
        %2040 = vmatprep.subr.mxu0 0.0
        %2041 = vmatpush1.msra.mxu0 0.0
        %2042 = vmatprep.subr.mxu0 0.0
        %2043 = vmatpush1.msra.mxu0 0.0
        %2044 = vmatprep.subr.mxu0 0.0
        %2045 = vmatpush1.msra.mxu0 0.0
        %2046 = vmatprep.subr.mxu0 0.0
        %2047 = vmatpush1.msra.mxu0 0.0
        %2048 = vmatprep.subr.mxu0 0.0
        %2049 = vmatpush1.msra.mxu0 0.0
        %2050 = vmatprep.subr.mxu0 0.0
        %2051 = vmatpush1.msra.mxu0 0.0
        %2052 = vmatprep.subr.mxu0 0.0
        %2053 = vmatpush1.msra.mxu0 0.0
        %2054 = vmatprep.subr.mxu0 0.0
        %2055 = vmatpush1.msra.mxu0 0.0
        %2056 = vmatprep.subr.mxu0 0.0
        %2057 = vmatpush1.msra.mxu0 0.0
        %2058 = vmatprep.subr.mxu0 0.0
        %2059 = vmatpush1.msra.mxu0 0.0
        %2060 = vmatprep.subr.mxu0 0.0
        %2061 = vmatpush1.msra.mxu0 0.0
        %2062 = vmatprep.mubr.f32.mxu0 0.0
        %2063 = vmatmul.mubr.f32.gmra.mrb[0].mxu0 %v423
        %v2064 = vpop.f32.mrb[0].mxu0
        %v2065 = vadd.f32 0.0, %v2064
        %v2066 = vpop.f32.mrb[0].mxu0
        %2067 = vdwg.mxu0
        %2068 = vmatprep.subr.mxu0 0.0
        %2069 = vmatpush1.msra.mxu0 %v1948
        %2070 = vmatprep.subr.mxu0 0.0
        %2071 = vmatpush1.msra.mxu0 %v1949
        %2072 = vmatprep.subr.mxu0 0.0
        %2073 = vmatpush1.msra.mxu0 %v1950
        %2074 = vmatprep.subr.mxu0 0.0
        %2075 = vmatpush1.msra.mxu0 %v1951
        %2076 = vmatprep.subr.mxu0 0.0
        %2077 = vmatpush1.msra.mxu0 %v1952
        %2078 = vmatprep.subr.mxu0 0.0
        %2079 = vmatpush1.msra.mxu0 %v1953
        %2080 = vmatprep.subr.mxu0 0.0
        %2081 = vmatpush1.msra.mxu0 %v1954
        %2082 = vmatprep.subr.mxu0 0.0
        %2083 = vmatpush1.msra.mxu0 %v1955
        %2084 = vmatprep.subr.mxu0 0.0
        %2085 = vmatpush1.msra.mxu0 %v1956
        %2086 = vmatprep.subr.mxu0 0.0
        %2087 = vmatpush1.msra.mxu0 %v1957
        %2088 = vmatprep.subr.mxu0 0.0
        %2089 = vmatpush1.msra.mxu0 %v1958
        %2090 = vmatprep.subr.mxu0 0.0
        %2091 = vmatpush1.msra.mxu0 %v1959
        %2092 = vmatprep.subr.mxu0 0.0
        %2093 = vmatpush1.msra.mxu0 %v1960
        %2094 = vmatprep.subr.mxu0 0.0
        %2095 = vmatpush1.msra.mxu0 %v1961
        %2096 = vmatprep.subr.mxu0 0.0
        %2097 = vmatpush1.msra.mxu0 %v1962
        %2098 = vmatprep.subr.mxu0 0.0
        %2099 = vmatpush1.msra.mxu0 %v1963
        %2100 = vmatprep.subr.mxu0 0.0
        %2101 = vmatpush1.msra.mxu0 0.0
        %2102 = vmatprep.subr.mxu0 0.0
        %2103 = vmatpush1.msra.mxu0 0.0
        %2104 = vmatprep.subr.mxu0 0.0
        %2105 = vmatpush1.msra.mxu0 0.0
        %2106 = vmatprep.subr.mxu0 0.0
        %2107 = vmatpush1.msra.mxu0 0.0
        %2108 = vmatprep.subr.mxu0 0.0
        %2109 = vmatpush1.msra.mxu0 0.0
        %2110 = vmatprep.subr.mxu0 0.0
        %2111 = vmatpush1.msra.mxu0 0.0
        %2112 = vmatprep.subr.mxu0 0.0
        %2113 = vmatpush1.msra.mxu0 0.0
        %2114 = vmatprep.subr.mxu0 0.0
        %2115 = vmatpush1.msra.mxu0 0.0
        %2116 = vmatprep.subr.mxu0 0.0
        %2117 = vmatpush1.msra.mxu0 0.0
        %2118 = vmatprep.subr.mxu0 0.0
        %2119 = vmatpush1.msra.mxu0 0.0
        %2120 = vmatprep.subr.mxu0 0.0
        %2121 = vmatpush1.msra.mxu0 0.0
        %2122 = vmatprep.subr.mxu0 0.0
        %2123 = vmatpush1.msra.mxu0 0.0
        %2124 = vmatprep.subr.mxu0 0.0
        %2125 = vmatpush1.msra.mxu0 0.0
        %2126 = vmatprep.subr.mxu0 0.0
        %2127 = vmatpush1.msra.mxu0 0.0
        %2128 = vmatprep.subr.mxu0 0.0
        %2129 = vmatpush1.msra.mxu0 0.0
        %2130 = vmatprep.subr.mxu0 0.0
        %2131 = vmatpush1.msra.mxu0 0.0
        %2132 = vmatprep.mubr.f32.mxu0 0.0
        %2133 = vmatmul.mubr.f32.gmra.mrb[0].mxu0 %v424
        %v2134 = vpop.f32.mrb[0].mxu0
        %v2135 = vadd.f32 0.0, %v2134
        %v2136 = vpop.f32.mrb[0].mxu0
        %2137 = vdwg.mxu0
        %2138 = vmatprep.subr.mxu0 0.0
        %2139 = vmatpush1.msra.mxu0 %v1965
        %2140 = vmatprep.subr.mxu0 0.0
        %2141 = vmatpush1.msra.mxu0 %v1966
        %2142 = vmatprep.subr.mxu0 0.0
        %2143 = vmatpush1.msra.mxu0 %v1967
        %2144 = vmatprep.subr.mxu0 0.0
        %2145 = vmatpush1.msra.mxu0 %v1968
        %2146 = vmatprep.subr.mxu0 0.0
        %2147 = vmatpush1.msra.mxu0 %v1969
        %2148 = vmatprep.subr.mxu0 0.0
        %2149 = vmatpush1.msra.mxu0 %v1970
        %2150 = vmatprep.subr.mxu0 0.0
        %2151 = vmatpush1.msra.mxu0 %v1971
        %2152 = vmatprep.subr.mxu0 0.0
        %2153 = vmatpush1.msra.mxu0 %v1972
        %2154 = vmatprep.subr.mxu0 0.0
        %2155 = vmatpush1.msra.mxu0 %v1973
        %2156 = vmatprep.subr.mxu0 0.0
        %2157 = vmatpush1.msra.mxu0 %v1974
        %2158 = vmatprep.subr.mxu0 0.0
        %2159 = vmatpush1.msra.mxu0 %v1975
        %2160 = vmatprep.subr.mxu0 0.0
        %2161 = vmatpush1.msra.mxu0 %v1976
        %2162 = vmatprep.subr.mxu0 0.0
        %2163 = vmatpush1.msra.mxu0 %v1977
        %2164 = vmatprep.subr.mxu0 0.0
        %2165 = vmatpush1.msra.mxu0 %v1978
        %2166 = vmatprep.subr.mxu0 0.0
        %2167 = vmatpush1.msra.mxu0 %v1979
        %2168 = vmatprep.subr.mxu0 0.0
        %2169 = vmatpush1.msra.mxu0 %v1980
        %2170 = vmatprep.subr.mxu0 0.0
        %2171 = vmatpush1.msra.mxu0 0.0
        %2172 = vmatprep.subr.mxu0 0.0
        %2173 = vmatpush1.msra.mxu0 0.0
        %2174 = vmatprep.subr.mxu0 0.0
        %2175 = vmatpush1.msra.mxu0 0.0
        %2176 = vmatprep.subr.mxu0 0.0
        %2177 = vmatpush1.msra.mxu0 0.0
        %2178 = vmatprep.subr.mxu0 0.0
        %2179 = vmatpush1.msra.mxu0 0.0
        %2180 = vmatprep.subr.mxu0 0.0
        %2181 = vmatpush1.msra.mxu0 0.0
        %2182 = vmatprep.subr.mxu0 0.0
        %2183 = vmatpush1.msra.mxu0 0.0
        %2184 = vmatprep.subr.mxu0 0.0
        %2185 = vmatpush1.msra.mxu0 0.0
        %2186 = vmatprep.subr.mxu0 0.0
        %2187 = vmatpush1.msra.mxu0 0.0
        %2188 = vmatprep.subr.mxu0 0.0
        %2189 = vmatpush1.msra.mxu0 0.0
        %2190 = vmatprep.subr.mxu0 0.0
        %2191 = vmatpush1.msra.mxu0 0.0
        %2192 = vmatprep.subr.mxu0 0.0
        %2193 = vmatpush1.msra.mxu0 0.0
        %2194 = vmatprep.subr.mxu0 0.0
        %2195 = vmatpush1.msra.mxu0 0.0
        %2196 = vmatprep.subr.mxu0 0.0
        %2197 = vmatpush1.msra.mxu0 0.0
        %2198 = vmatprep.subr.mxu0 0.0
        %2199 = vmatpush1.msra.mxu0 0.0
        %2200 = vmatprep.subr.mxu0 0.0
        %2201 = vmatpush1.msra.mxu0 0.0
        %2202 = vmatprep.mubr.f32.mxu0 0.0
        %2203 = vmatmul.mubr.f32.gmra.mrb[0].mxu0 %v425
        %v2204 = vpop.f32.mrb[0].mxu0
        %v2205 = vadd.f32 0.0, %v2204
        %v2206 = vpop.f32.mrb[0].mxu0
        %2207 = vdwg.mxu0
        %2208 = vmatprep.subr.mxu0 0.0
        %2209 = vmatpush1.xpose.msra.mxu0 %v2135
        %2210 = vmatprep.subr.mxu0 0.0
        %2211 = vmatpush1.xpose.msra.mxu0 0.0
        %2212 = vmatprep.subr.mxu0 0.0
        %2213 = vmatpush1.xpose.msra.mxu0 0.0
        %2214 = vmatprep.subr.mxu0 0.0
        %2215 = vmatpush1.xpose.msra.mxu0 0.0
        %2216 = vmatprep.subr.mxu0 0.0
        %2217 = vmatpush1.xpose.msra.mxu0 0.0
        %2218 = vmatprep.subr.mxu0 0.0
        %2219 = vmatpush1.xpose.msra.mxu0 0.0
        %2220 = vmatprep.subr.mxu0 0.0
        %2221 = vmatpush1.xpose.msra.mxu0 0.0
        %2222 = vmatprep.subr.mxu0 0.0
        %2223 = vmatpush1.xpose.msra.mxu0 0.0
        %2224 = vmatprep.subr.mxu0 0.0
        %2225 = vmatpush1.xpose.msra.mxu0 0.0
        %2226 = vmatprep.subr.mxu0 0.0
        %2227 = vmatpush1.xpose.msra.mxu0 0.0
        %2228 = vmatprep.subr.mxu0 0.0
        %2229 = vmatpush1.xpose.msra.mxu0 0.0
        %2230 = vmatprep.subr.mxu0 0.0
        %2231 = vmatpush1.xpose.msra.mxu0 0.0
        %2232 = vmatprep.subr.mxu0 0.0
        %2233 = vmatpush1.xpose.msra.mxu0 0.0
        %2234 = vmatprep.subr.mxu0 0.0
        %2235 = vmatpush1.xpose.msra.mxu0 0.0
        %2236 = vmatprep.subr.mxu0 0.0
        %2237 = vmatpush1.xpose.msra.mxu0 0.0
        %2238 = vmatprep.subr.mxu0 0.0
        %2239 = vmatpush1.xpose.msra.mxu0 0.0
        %2240 = vmatprep.subr.mxu0 0.0
        %2241 = vmatpush1.xpose.msra.mxu0 0.0
        %2242 = vmatprep.subr.mxu0 0.0
        %2243 = vmatpush1.xpose.msra.mxu0 0.0
        %2244 = vmatprep.subr.mxu0 0.0
        %2245 = vmatpush1.xpose.msra.mxu0 0.0
        %2246 = vmatprep.subr.mxu0 0.0
        %2247 = vmatpush1.xpose.msra.mxu0 0.0
        %2248 = vmatprep.subr.mxu0 0.0
        %2249 = vmatpush1.xpose.msra.mxu0 0.0
        %2250 = vmatprep.subr.mxu0 0.0
        %2251 = vmatpush1.xpose.msra.mxu0 0.0
        %2252 = vmatprep.subr.mxu0 0.0
        %2253 = vmatpush1.xpose.msra.mxu0 0.0
        %2254 = vmatprep.subr.mxu0 0.0
        %2255 = vmatpush1.xpose.msra.mxu0 0.0
        %2256 = vmatprep.subr.mxu0 0.0
        %2257 = vmatpush1.xpose.msra.mxu0 0.0
        %2258 = vmatprep.subr.mxu0 0.0
        %2259 = vmatpush1.xpose.msra.mxu0 0.0
        %2260 = vmatprep.subr.mxu0 0.0
        %2261 = vmatpush1.xpose.msra.mxu0 0.0
        %2262 = vmatprep.subr.mxu0 0.0
        %2263 = vmatpush1.xpose.msra.mxu0 0.0
        %2264 = vmatprep.subr.mxu0 0.0
        %2265 = vmatpush1.xpose.msra.mxu0 0.0
        %2266 = vmatprep.subr.mxu0 0.0
        %2267 = vmatpush1.xpose.msra.mxu0 0.0
        %2268 = vmatprep.subr.mxu0 0.0
        %2269 = vmatpush1.xpose.msra.mxu0 0.0
        %2270 = vmatprep.subr.mxu0 0.0
        %2271 = vmatpush1.xpose.msra.mxu0 0.0
        %2272 = vmatprep.mubr.f32.mxu0 0.0
        %2273 = vmatmul.mubr.f32.gmra.mrb[0].mxu0 %v2065
        %v2274 = vpop.f32.mrb[0].mxu0
        %v2275 = vadd.f32 0.0, %v2274
        %v2276 = vpop.f32.mrb[0].mxu0
        %2277 = vdwg.mxu0
        %v2278 = vsel %vm770, %v2275, -inf
        %2279 = vmax.xlane.f32.xlu0 %v2278
        %v2280 = vpop.xlane.xlu0 %2279
        %v2281 = vsub.f32 %v2275, %v2280
        %v2282 = vmul.f32 %v2281, 1.442695
        %v2283 = vpow.pop %v2282
        %v2284 = vsel %vm770, %v2283, 0.0
        %2285 = vadd.xlane.f32.xlu0 %v2284
        %v2286 = vpop.xlane.xlu0 %2285
        %v2287 = vrcp.pop %v2286
        %v2288 = vmul.f32 %v2283, %v2287
        %v2290 = vsel %vm770, %v2288, 0
        %2292 = vmatprep.subr.mxu0 0.0
        %2293 = vmatpush1.msra.mxu0 %v2205
        %2294 = vmatprep.subr.mxu0 0.0
        %2295 = vmatpush1.msra.mxu0 0.0
        %2296 = vmatprep.subr.mxu0 0.0
        %2297 = vmatpush1.msra.mxu0 0.0
        %2298 = vmatprep.subr.mxu0 0.0
        %2299 = vmatpush1.msra.mxu0 0.0
        %2300 = vmatprep.subr.mxu0 0.0
        %2301 = vmatpush1.msra.mxu0 0.0
        %2302 = vmatprep.subr.mxu0 0.0
        %2303 = vmatpush1.msra.mxu0 0.0
        %2304 = vmatprep.subr.mxu0 0.0
        %2305 = vmatpush1.msra.mxu0 0.0
        %2306 = vmatprep.subr.mxu0 0.0
        %2307 = vmatpush1.msra.mxu0 0.0
        %2308 = vmatprep.subr.mxu0 0.0
        %2309 = vmatpush1.msra.mxu0 0.0
        %2310 = vmatprep.subr.mxu0 0.0
        %2311 = vmatpush1.msra.mxu0 0.0
        %2312 = vmatprep.subr.mxu0 0.0
        %2313 = vmatpush1.msra.mxu0 0.0
        %2314 = vmatprep.subr.mxu0 0.0
        %2315 = vmatpush1.msra.mxu0 0.0
        %2316 = vmatprep.subr.mxu0 0.0
        %2317 = vmatpush1.msra.mxu0 0.0
        %2318 = vmatprep.subr.mxu0 0.0
        %2319 = vmatpush1.msra.mxu0 0.0
        %2320 = vmatprep.subr.mxu0 0.0
        %2321 = vmatpush1.msra.mxu0 0.0
        %2322 = vmatprep.subr.mxu0 0.0
        %2323 = vmatpush1.msra.mxu0 0.0
        %2324 = vmatprep.subr.mxu0 0.0
        %2325 = vmatpush1.msra.mxu0 0.0
        %2326 = vmatprep.subr.mxu0 0.0
        %2327 = vmatpush1.msra.mxu0 0.0
        %2328 = vmatprep.subr.mxu0 0.0
        %2329 = vmatpush1.msra.mxu0 0.0
        %2330 = vmatprep.subr.mxu0 0.0
        %2331 = vmatpush1.msra.mxu0 0.0
        %2332 = vmatprep.subr.mxu0 0.0
        %2333 = vmatpush1.msra.mxu0 0.0
        %2334 = vmatprep.subr.mxu0 0.0
        %2335 = vmatpush1.msra.mxu0 0.0
        %2336 = vmatprep.subr.mxu0 0.0
        %2337 = vmatpush1.msra.mxu0 0.0
        %2338 = vmatprep.subr.mxu0 0.0
        %2339 = vmatpush1.msra.mxu0 0.0
        %2340 = vmatprep.subr.mxu0 0.0
        %2341 = vmatpush1.msra.mxu0 0.0
        %2342 = vmatprep.subr.mxu0 0.0
        %2343 = vmatpush1.msra.mxu0 0.0
        %2344 = vmatprep.subr.mxu0 0.0
        %2345 = vmatpush1.msra.mxu0 0.0
        %2346 = vmatprep.subr.mxu0 0.0
        %2347 = vmatpush1.msra.mxu0 0.0
        %2348 = vmatprep.subr.mxu0 0.0
        %2349 = vmatpush1.msra.mxu0 0.0
        %2350 = vmatprep.subr.mxu0 0.0
        %2351 = vmatpush1.msra.mxu0 0.0
        %2352 = vmatprep.subr.mxu0 0.0
        %2353 = vmatpush1.msra.mxu0 0.0
        %2354 = vmatprep.subr.mxu0 0.0
        %2355 = vmatpush1.msra.mxu0 0.0
        %2356 = vmatprep.mubr.f32.mxu0 0.0
        %2357 = vmatmul.mubr.f32.gmra.mrb[0].mxu0 %v2290
        %v2358 = vpop.f32.mrb[0].mxu0
        %v2359 = vadd.f32 0.0, %v2358
        %v2360 = vpop.f32.mrb[0].mxu0
        %2361 = vdwg.mxu0
        %2362 = vmatprep.subr.mxu0 0.0
        %2363 = vmatpush1.msra.mxu0 %v1982
        %2364 = vmatprep.subr.mxu0 0.0
        %2365 = vmatpush1.msra.mxu0 %v1983
        %2366 = vmatprep.subr.mxu0 0.0
        %2367 = vmatpush1.msra.mxu0 %v1984
        %2368 = vmatprep.subr.mxu0 0.0
        %2369 = vmatpush1.msra.mxu0 %v1985
        %2370 = vmatprep.subr.mxu0 0.0
        %2371 = vmatpush1.msra.mxu0 %v1986
        %2372 = vmatprep.subr.mxu0 0.0
        %2373 = vmatpush1.msra.mxu0 %v1987
        %2374 = vmatprep.subr.mxu0 0.0
        %2375 = vmatpush1.msra.mxu0 %v1988
        %2376 = vmatprep.subr.mxu0 0.0
        %2377 = vmatpush1.msra.mxu0 %v1989
        %2378 = vmatprep.subr.mxu0 0.0
        %2379 = vmatpush1.msra.mxu0 %v1990
        %2380 = vmatprep.subr.mxu0 0.0
        %2381 = vmatpush1.msra.mxu0 %v1991
        %2382 = vmatprep.subr.mxu0 0.0
        %2383 = vmatpush1.msra.mxu0 %v1992
        %2384 = vmatprep.subr.mxu0 0.0
        %2385 = vmatpush1.msra.mxu0 %v1993
        %2386 = vmatprep.subr.mxu0 0.0
        %2387 = vmatpush1.msra.mxu0 %v1994
        %2388 = vmatprep.subr.mxu0 0.0
        %2389 = vmatpush1.msra.mxu0 %v1995
        %2390 = vmatprep.subr.mxu0 0.0
        %2391 = vmatpush1.msra.mxu0 %v1996
        %2392 = vmatprep.subr.mxu0 0.0
        %2393 = vmatpush1.msra.mxu0 %v1997
        %2394 = vmatprep.subr.mxu0 0.0
        %2395 = vmatpush1.msra.mxu0 0.0
        %2396 = vmatprep.subr.mxu0 0.0
        %2397 = vmatpush1.msra.mxu0 0.0
        %2398 = vmatprep.subr.mxu0 0.0
        %2399 = vmatpush1.msra.mxu0 0.0
        %2400 = vmatprep.subr.mxu0 0.0
        %2401 = vmatpush1.msra.mxu0 0.0
        %2402 = vmatprep.subr.mxu0 0.0
        %2403 = vmatpush1.msra.mxu0 0.0
        %2404 = vmatprep.subr.mxu0 0.0
        %2405 = vmatpush1.msra.mxu0 0.0
        %2406 = vmatprep.subr.mxu0 0.0
        %2407 = vmatpush1.msra.mxu0 0.0
        %2408 = vmatprep.subr.mxu0 0.0
        %2409 = vmatpush1.msra.mxu0 0.0
        %2410 = vmatprep.subr.mxu0 0.0
        %2411 = vmatpush1.msra.mxu0 0.0
        %2412 = vmatprep.subr.mxu0 0.0
        %2413 = vmatpush1.msra.mxu0 0.0
        %2414 = vmatprep.subr.mxu0 0.0
        %2415 = vmatpush1.msra.mxu0 0.0
        %2416 = vmatprep.subr.mxu0 0.0
        %2417 = vmatpush1.msra.mxu0 0.0
        %2418 = vmatprep.subr.mxu0 0.0
        %2419 = vmatpush1.msra.mxu0 0.0
        %2420 = vmatprep.subr.mxu0 0.0
        %2421 = vmatpush1.msra.mxu0 0.0
        %2422 = vmatprep.subr.mxu0 0.0
        %2423 = vmatpush1.msra.mxu0 0.0
        %2424 = vmatprep.subr.mxu0 0.0
        %2425 = vmatpush1.msra.mxu0 0.0
        %2426 = vmatprep.mubr.f32.mxu0 0.0
        %2427 = vmatmul.mubr.f32.gmra.mrb[0].mxu0 %v2359
        %v2428 = vpop.f32.mrb[0].mxu0
        %v2429 = vadd.f32 0.0, %v2428
        %v2430 = vpop.f32.mrb[0].mxu0
        %2431 = vdwg.mxu0
        %v2432 = vadd.f32 %v1929, %v2429
        %2433 = vst [vmem:[%s422] sm:$0xff] %v2432
        %s2434 = sand.u32 %s199, 1
        %s2435 = scalar_lea.sflag [#allocation4], %s2434
        %s2436 = sand.u32 %s199, 1
        %s2437 = smul.addr %s2436, 8
        %s2438 = scalar_lea.vmem [#allocation14], %s2437
        // Predicated region
        $region77: #{tpu_custom_call.1} parent=47 // pred_check
          %p2439 = pneg %p209
        $region78: #{tpu_custom_call.1} parent=47 // pred_check_branch
          %2441 = sbr.rel (%p2439) target = $region80
        $region79: #{tpu_custom_call.1} parent=47 // pred_region
          %s2443 = ssub.s32 128, 128
          %2444 = vsyncadd %s2435, %s2443
          %s2445 = smul.addr %s29, 128
          %s2446 = scalar_lea.hbm %s7, %s2445
          %s2448 = sshll.u32 %s2438, 4
          %s2449 = int_to_ptr.vmem [resolvable:$true] %s2448
          %2451 = dma.vmem_to_hbm [thread:$0]  %s2449, 128, %s2446, %s2435
        $region80: #{tpu_custom_call.1} parent=47 // pred_fallthru
          _
      $region48: #{tpu_custom_call.1} parent=5 // pred_fallthru
        _
      %p2452 = scmp.le.s32.totalorder 2, %s24
      // Predicated region
      $region81: #{tpu_custom_call.1} parent=5 // pred_check
        %p2453 = pneg %p2452
      $region82: #{tpu_custom_call.1} parent=5 // pred_check_branch
        %2455 = sbr.rel (%p2453) target = $region84
      $region83: #{tpu_custom_call.1} parent=5 // pred_region
        %s2456 = ssub.s32 %s24, 2
        // Predicated region
        $region85: #{tpu_custom_call.1} parent=83 // pred_check
          %p2457 = pneg %p215
        $region86: #{tpu_custom_call.1} parent=83 // pred_check_branch
          %2459 = sbr.rel (%p2457) target = $region88
        $region87: #{tpu_custom_call.1} parent=83 // pred_region
          %s2460 = sand.u32 %s200, 1
          %s2461 = scalar_lea.sflag [#allocation4], %s2460
          %s2462 = sand.u32 %s200, 1
          %s2463 = smul.addr %s2462, 8
          %s2464 = scalar_lea.vmem [#allocation14], %s2463
          %2465 = dma.done %s2461, 128
        $region88: #{tpu_custom_call.1} parent=83 // pred_fallthru
          _
      $region84: #{tpu_custom_call.1} parent=5 // pred_fallthru
        _
    $region6: #{tpu_custom_call.1} parent=1 // loop_footer
      %s28 = sadd.s32 1, %s24
    $region7: #{tpu_custom_call.1} parent=1 // loop_footer_branch
      %23 = sbr.rel target = $region3
    $region8: #{tpu_custom_call.1} parent=1 // loop_exit
      _
    %2466 = vsyncpa [#allocation3], 1
    %s2467 = scalar_lea.sflag [#allocation3], 1
    %2468 = vsyncpa %s2467, 1
    %2469 = vsyncpa [#allocation6], 1
    %s2470 = scalar_lea.sflag [#allocation6], 1
    %2471 = vsyncpa %s2470, 1
    %2472 = vsyncpa [#allocation9], 1
    %2473 = vsyncpa [#allocation12], 1
    %2474 = vsyncpa [#allocation4], 1
    %s2475 = scalar_lea.sflag [#allocation4], 1
    %2476 = vsyncpa %s2475, 1

</llo_original>
